<compile_context>
chip_gen: v5e
topology: v5e:2x2
jax: 0.10.0
libtpu: 0.0.40
codegen_flags: <defaults>
</compile_context>

<pallas_src>
import numpy as np

import jax
import jax.numpy as jnp
from jax import lax
from jax.experimental import pallas as pl
from jax.experimental.pallas import tpu as pltpu


_LANE = 512             # lane width of the fallback slab layout for tiny K
_NATURAL_MIN_K = 128    # K >= this -> tile the natural (rows, K) layout (no host pad)
_BLOCK_BYTES = 1 << 20  # per-input VMEM block budget (~85% of HBM roofline at 1 MiB)


def _round_up(a, b):
    return -(-a // b) * b


def _slab_rows(itemsize):
    # Sublane packing granularity: f32 -> 8, bf16 -> 16, int8/fp8 -> 32.
    return max(8, 32 // max(1, itemsize))


# ---------------------------------------------------------------------------
# Fused Pallas reduction kernel
# ---------------------------------------------------------------------------
def _make_fused_loss_kernel(tm, slab, n_valid_rows, n_valid_lanes, lanes_covered, bpc):
    """Fused reduction over (tm, tk) blocks of the x / y magnitudes.

    Produces four (8, tk) float32 partial-sum accumulators per core:
        sum((y-x)^2), sum(y^2), sum(|log x - log y|), sum(|x-y|)
    Out-of-bounds rows / lanes of partial blocks are forced to x = y = 1.0, so
    they contribute exactly 0 to every term except sum(y^2), which gains +1 per
    masked position and is removed by a static host-side correction.
    """
    n_slabs = tm // slab
    need_lane_mask = lanes_covered != n_valid_lanes

    def kernel(x_ref, y_ref, num_ref, den_ref, logm_ref, linm_ref):
        i = pl.program_id(1)          # row-block  (reduction, "arbitrary")
        j = pl.program_id(2)          # lane-block (reduction, "arbitrary")

        @pl.when((i == 0) & (j == 0))
        def _init():
            num_ref[...] = jnp.zeros_like(num_ref)
            den_ref[...] = jnp.zeros_like(den_ref)
            logm_ref[...] = jnp.zeros_like(logm_ref)
            linm_ref[...] = jnp.zeros_like(linm_ref)

        tk = x_ref.shape[-1]
        block_row0 = (pl.program_id(0) * bpc + i) * tm
        rows_left = n_valid_rows - block_row0          # blocks always start in-bounds
        row_iota = lax.broadcasted_iota(jnp.int32, (slab, 1), 0)
        if need_lane_mask:                             # only the ragged last lane block
            lane_iota = lax.broadcasted_iota(jnp.int32, (1, tk), 1)
            lane_ok = (j * tk + lane_iota) < n_valid_lanes
        else:
            lane_ok = None

        def slab_terms(g, carry):
            num, den, logm, linm = carry
            r0 = g * slab
            if not isinstance(r0, int):
                r0 = pl.multiple_of(r0, slab)
            row_ok = (row_iota + r0) < rows_left       # (slab, 1)
            valid = row_ok if lane_ok is None else jnp.logical_and(row_ok, lane_ok)
            # Select BEFORE the logs: garbage rows/lanes can never reach log().
            x = jnp.where(valid, x_ref[pl.ds(r0, slab), :].astype(jnp.float32), 1.0)
            y = jnp.where(valid, y_ref[pl.ds(r0, slab), :].astype(jnp.float32), 1.0)
            d = y - x

            def fold(e):                               # (slab, tk) -> (8, tk): VPU adds only
                if slab == 8:
                    return e
                return jnp.sum(e.reshape(slab // 8, 8, tk), axis=0)

            return (num + fold(d * d),
                    den + fold(y * y),
                    logm + fold(jnp.abs(jnp.log(x) - jnp.log(y))),
                    linm + fold(jnp.abs(d)))

        zeros = jnp.zeros((8, tk), jnp.float32)
        unroll = True if n_slabs <= 8 else (2 if n_slabs % 2 == 0 else 1)
        num, den, logm, linm = lax.fori_loop(
            0, n_slabs, slab_terms, (zeros, zeros, zeros, zeros), unroll=unroll)

        num_ref[...] += num
        den_ref[...] += den
        logm_ref[...] += logm
        linm_ref[...] += linm

    return kernel


def _plan_rows(rows, row_bytes_vmem, gran, block_bytes=_BLOCK_BYTES):
    """Pick (tm, p, bpc): row-block size, leading 'parallel' axis, row-blocks per core."""
    tm_max = max(gran, (block_bytes // max(1, row_bytes_vmem)) // gran * gran)
    max_blocks = -(-rows // gran)                 # smallest legal tm -> most blocks
    min_blocks = -(-rows // tm_max)               # budget tm -> fewest blocks
    # >=2 blocks gives DMA/compute overlap; aim for 4 so the overlap survives a
    # 2-way core split; even counts enable that split at all.
    nb = min(max_blocks, max(min_blocks, 4))
    if nb > 1 and nb % 2 and nb < max_blocks:
        nb += 1
    tm = max(gran, _round_up(-(-rows // nb), gran))
    nb = -(-rows // tm)                           # every block starts in-bounds
    if nb >= 2 and nb % 2 == 0:
        return tm, 2, nb // 2
    return tm, 1, nb


def _fused_loss_sums(x_mag, y_mag):
    """One fused streaming pass over the magnitudes.  Returns
    (sum((y-x)^2), sum(y^2), sum(|log x - log y|), sum(|x-y|), element_count)."""
    assert x_mag.shape == y_mag.shape and x_mag.dtype == y_mag.dtype
    k = int(x_mag.shape[-1])
    n_valid = int(np.prod(x_mag.shape))
    itemsize = x_mag.dtype.itemsize
    slab = _slab_rows(itemsize)

    if k >= _NATURAL_MIN_K:
        # Lane-dense enough: tile the natural (rows, K) layout directly -- no
        # host-side pad/reshape copy; ragged row/lane tails are masked in-kernel.
        lanes = k
        xv = x_mag.reshape(-1, k)
        yv = y_mag.reshape(-1, k)
        rows = xv.shape[0]
    else:
        # Tiny K (fft <= 128): a (rows, K) block would waste most of every vreg,
        # so re-tile row-major into a 512-lane slab (one extra elementwise copy;
        # negligible next to the rfft that produces the magnitudes).
        lanes = _LANE
        rows = -(-n_valid // lanes)
        pad = rows * lanes - n_valid
        xv = jnp.pad(x_mag.reshape(-1), (0, pad), constant_values=1.0).reshape(rows, lanes)
        yv = jnp.pad(y_mag.reshape(-1), (0, pad), constant_values=1.0).reshape(rows, lanes)

    tk = lanes if lanes <= _LANE else _LANE        # lane tile (<= 512)
    n_lane_blocks = -(-lanes // tk)
    lanes_covered = n_lane_blocks * tk
    row_bytes_vmem = _round_up(tk, 128) * itemsize  # VMEM rows are lane-padded
    tm, p, bpc = _plan_rows(rows, row_bytes_vmem, slab)
    covered = (p * bpc * tm) * lanes_covered        # positions the grid touches

    kernel = _make_fused_loss_kernel(tm, slab, rows, lanes, lanes_covered, bpc)

    in_spec = pl.BlockSpec((tm, tk), lambda pc, i, j, _b=bpc: (pc * _b + i, j))
    acc_spec = pl.BlockSpec((None, 8, tk), lambda pc, i, j: (pc, 0, 0))
    acc_shape = jax.ShapeDtypeStruct((p, 8, tk), jnp.float32)

    num, den, logm, linm = pl.pallas_call(
        kernel,
        grid=(p, bpc, n_lane_blocks),
        in_specs=[in_spec, in_spec],
        out_specs=[acc_spec, acc_spec, acc_spec, acc_spec],
        out_shape=[acc_shape, acc_shape, acc_shape, acc_shape],
        compiler_params=pltpu.CompilerParams(
            dimension_semantics=("parallel", "arbitrary", "arbitrary"),
            vmem_limit_bytes=32 * 1024 * 1024),
    )(xv, yv)

    # Masked / pad positions were forced to x = y = 1.0: they add exactly
    # (covered - n_valid) to sum(y^2) and 0 to every other term.
    sq_diff = jnp.sum(num)
    y_sq = jnp.sum(den) - jnp.float32(float(covered - n_valid))
    log_l1 = jnp.sum(logm)
    lin_l1 = jnp.sum(linm)
    return sq_diff, y_sq, log_l1, lin_l1, n_valid


# ---------------------------------------------------------------------------
# STFT (plain JAX) and loss wrappers
# ---------------------------------------------------------------------------
def _stft_magnitude(x, fft_size, hop_size, win_length, window, eps, out_dtype=jnp.float32):
    """x: (B, T). Returns eps-clamped STFT magnitudes, shape (B, frames, fft//2+1).
    Matches torch.stft(center=True, pad_mode='reflect', onesided=True) followed by
    sqrt(clamp(|.|^2, min=eps)) as in the reference STFTLoss.stft()."""
    # TODO(synk): the framing gather + jnp.fft.rfft stay in XLA (FFT has no Pallas
    # equivalent); for low hop ratios they dominate end-to-end time (overlap
    # factor fft/hop of duplicated data) -- wrapper-side optimization target.
    pad = fft_size // 2
    xp = jnp.pad(x, ((0, 0), (pad, pad)), mode="reflect")
    n_frames = 1 + (xp.shape[-1] - fft_size) // hop_size
    idx = jnp.arange(n_frames)[:, None] * hop_size + jnp.arange(fft_size)[None, :]
    frames = xp[:, idx]                               # (B, n_frames, fft_size)
    left = (fft_size - win_length) // 2               # torch centers short windows
    w_full = jnp.zeros((fft_size,), jnp.float32).at[left:left + win_length].set(
        jnp.asarray(window, jnp.float32))
    spec = jnp.fft.rfft(frames * w_full, axis=-1)
    mag = jnp.sqrt(jnp.maximum(spec.real ** 2 + spec.imag ** 2, eps))
    return mag.astype(out_dtype)                      # cast fuses into this producer


def _make_window(name, n):
    k = np.arange(n)
    if name == "hann_window":
        w = 0.5 - 0.5 * np.cos(2.0 * np.pi * k / n)
    elif name == "hamming_window":
        w = 0.54 - 0.46 * np.cos(2.0 * np.pi * k / n)
    elif name == "blackman_window":
        w = 0.42 - 0.5 * np.cos(2.0 * np.pi * k / n) + 0.08 * np.cos(4.0 * np.pi * k / n)
    elif name == "bartlett_window":
        w = np.bartlett(n + 1)[:-1]
    elif name == "kaiser_window":
        w = np.kaiser(n + 1, 12.0)[:-1]
    else:
        raise ValueError(f"Unknown window: {name}")
    return w.astype(np.float32)


def _stft_loss_impl(x, y, window, fft_size, hop_size, win_length,
                    w_sc, w_log_mag, w_lin_mag, eps, reduction, mag_dtype):
    x2 = x.reshape(-1, x.shape[-1])
    y2 = y.reshape(-1, y.shape[-1])
    x_mag = _stft_magnitude(x2, fft_size, hop_size, win_length, window, eps, mag_dtype)
    y_mag = _stft_magnitude(y2, fft_size, hop_size, win_length, window, eps, mag_dtype)

    sq_diff, y_sq, log_l1, lin_l1, count = _fused_loss_sums(x_mag, y_mag)
    denom = jnp.float32(count) if reduction == "mean" else jnp.float32(1.0)

    loss = jnp.float32(0.0)
    if w_sc:
        loss = loss + w_sc * (jnp.sqrt(sq_diff) / jnp.sqrt(y_sq))
    if w_log_mag:
        loss = loss + w_log_mag * (log_l1 / denom)
    if w_lin_mag:
        loss = loss + w_lin_mag * (lin_l1 / denom)
    # TODO(synk): phase loss (w_phs), mel/chroma filterbank scaling and
    # scale_invariance are not implemented (module defaults disable them).
    return loss


_stft_loss_jit = jax.jit(_stft_loss_impl, static_argnums=(3, 4, 5, 6, 7, 8, 9, 10, 11))


def stft_loss(x, y, *, fft_size, hop_size, win_length, window,
              w_sc=1.0, w_log_mag=1.0, w_lin_mag=0.0, eps=1e-8,
              reduction="mean", mag_dtype=jnp.bfloat16):
    """JAX/Pallas equivalent of STFTLoss.forward (default weights; output='loss')."""
    if reduction not in ("mean", "sum"):
        raise ValueError(f"Invalid reduction: '{reduction}'.")
    return _stft_loss_jit(x, y, jnp.asarray(window, jnp.float32),
                          int(fft_size), int(hop_size), int(win_length),
                          float(w_sc), float(w_log_mag), float(w_lin_mag),
                          float(eps), reduction, mag_dtype)


class RandomResolutionSTFTLoss:
    """JAX/Pallas port of RandomResolutionSTFTLoss (default weights).

    mag_dtype: storage dtype of the STFT magnitudes fed to the fused Pallas loss
    kernel (the kernel always accumulates in float32).  bfloat16 (default) halves
    the HBM traffic of the mem-bound loss pass; pass jnp.float32 for full parity
    with the float32 PyTorch module.
    """

    def __init__(self, resolutions=3, min_fft_size=16, max_fft_size=32768,
                 min_hop_size=0.1, max_hop_size=1.0,
                 windows=("hann_window", "bartlett_window", "blackman_window",
                          "hamming_window", "kaiser_window"),
                 w_sc=1.0, w_log_mag=1.0, w_lin_mag=0.0,
                 randomize_rate=1, mag_dtype=jnp.bfloat16, seed=0):
        self.resolutions = resolutions
        self.min_fft_size = min_fft_size
        self.max_fft_size = max_fft_size
        self.min_hop_size = min_hop_size
        self.max_hop_size = max_hop_size
        self.windows = list(windows)
        self.w_sc = w_sc
        self.w_log_mag = w_log_mag
        self.w_lin_mag = w_lin_mag
        self.randomize_rate = randomize_rate
        self.mag_dtype = mag_dtype
        self._rng = np.random.RandomState(seed)
        self.nforwards = 0
        self.randomize_losses()

    def randomize_losses(self):
        self.configs = []
        lo = int(np.log2(self.min_fft_size))
        hi = int(np.log2(self.max_fft_size))
        for _ in range(self.resolutions):
            frame_size = 2 ** int(self._rng.randint(lo, hi))
            hop_size = max(1, int(frame_size * (
                self.min_hop_size + self._rng.rand() * (self.max_hop_size - self.min_hop_size))))
            win_length = int(frame_size * self._rng.choice([1.0, 0.5, 0.25]))
            window_name = str(self._rng.choice(self.windows))
            self.configs.append(dict(
                fft_size=frame_size, hop_size=hop_size, win_length=win_length,
                window=_make_window(window_name, win_length)))

    def __call__(self, x, y):
        if x.shape[-1] <= self.max_fft_size:
            raise ValueError(
                f"Input length ({x.shape[-1]}) must be larger than largest FFT size "
                f"({self.max_fft_size}).")
        if y.shape[-1] <= self.max_fft_size:
            raise ValueError(
                f"Target length ({y.shape[-1]}) must be larger than largest FFT size "
                f"({self.max_fft_size}).")
        if self.nforwards % self.randomize_rate == 0:
            self.randomize_losses()
        loss = jnp.float32(0.0)
        for cfg in self.configs:
            loss = loss + stft_loss(x, y, w_sc=self.w_sc, w_log_mag=self.w_log_mag,
                                    w_lin_mag=self.w_lin_mag, mag_dtype=self.mag_dtype, **cfg)
        loss = loss / len(self.configs)
        self.nforwards += 1
        return loss


# ---------------------------------------------------------------------------
# Pure-JAX reference (same STFT path, jnp reductions) for verification
# ---------------------------------------------------------------------------
def _reference_stft_loss(x, y, cfg, w_sc, w_log_mag, w_lin_mag, eps=1e-8,
                         mag_dtype=jnp.float32):
    xm = _stft_magnitude(x.reshape(-1, x.shape[-1]), cfg["fft_size"], cfg["hop_size"],
                         cfg["win_length"], cfg["window"], eps, mag_dtype).astype(jnp.float32)
    ym = _stft_magnitude(y.reshape(-1, y.shape[-1]), cfg["fft_size"], cfg["hop_size"],
                         cfg["win_length"], cfg["window"], eps, mag_dtype).astype(jnp.float32)
    sc = jnp.sqrt(jnp.sum((ym - xm) ** 2)) / jnp.sqrt(jnp.sum(ym ** 2))
    log_mag = jnp.mean(jnp.abs(jnp.log(xm) - jnp.log(ym)))
    lin_mag = jnp.mean(jnp.abs(xm - ym))
    return w_sc * sc + w_log_mag * log_mag + w_lin_mag * lin_mag


if __name__ == "__main__":
    key = jax.random.PRNGKey(0)
    kx, ky, k1, k2 = jax.random.split(key, 4)

    # ---- (1) Direct checks of the fused Pallas reduction kernel -------------
    def _check_sums(xm, ym, name, rtol=2e-4):
        got = _fused_loss_sums(xm, ym)[:4]
        xf, yf = xm.astype(jnp.float32), ym.astype(jnp.float32)
        ref = (jnp.sum((yf - xf) ** 2), jnp.sum(yf ** 2),
               jnp.sum(jnp.abs(jnp.log(xf) - jnp.log(yf))), jnp.sum(jnp.abs(xf - yf)))
        for g, r in zip(got, ref):
            g = jax.block_until_ready(g)
            if not jnp.allclose(g, r, rtol=rtol, atol=1e-2):
                raise AssertionError(f"Fused kernel mismatch ({name}): pallas={g} ref={r}")

    xm = jax.random.uniform(k1, (530, 513), jnp.float32, minval=0.1, maxval=4.0)
    ym = jax.random.uniform(k2, (530, 513), jnp.float32, minval=0.1, maxval=4.0)
    _check_sums(xm, ym, "natural f32 (ragged rows + ragged lane block)")
    _check_sums(xm.astype(jnp.bfloat16), ym.astype(jnp.bfloat16), "natural bf16")
    _check_sums(xm[:300, :65], ym[:300, :65], "small-K slab path")

    # ---- (2) End-to-end RandomResolutionSTFTLoss (deterministic configs) ----
    B, T = 2, 4096
    x = jax.random.normal(kx, (B, T), dtype=jnp.float32)
    y = x + 0.1 * jax.random.normal(ky, (B, T), dtype=jnp.float32)

    mod = RandomResolutionSTFTLoss(resolutions=3, min_fft_size=16, max_fft_size=1024, seed=0)
    loss = jax.block_until_ready(mod(x, y))

    ref = jnp.float32(0.0)
    for cfg in mod.configs:   # configs actually used by the forward above
        ref = ref + _reference_stft_loss(x, y, cfg, mod.w_sc, mod.w_log_mag, mod.w_lin_mag,
                                         mag_dtype=mod.mag_dtype)
    ref = ref / len(mod.configs)
    if not jnp.allclose(loss, ref, rtol=2e-3, atol=1e-4):
        raise AssertionError(f"Module mismatch: pallas={loss} ref={ref}")

    # ---- (3) Full-precision (float32 magnitudes) single-resolution check ----
    cfg32 = dict(fft_size=256, hop_size=64, win_length=256,
                 window=_make_window("hann_window", 256))
    l32 = jax.block_until_ready(stft_loss(x, y, mag_dtype=jnp.float32, **cfg32))
    r32 = _reference_stft_loss(x, y, cfg32, 1.0, 1.0, 0.0, mag_dtype=jnp.float32)
    if not jnp.allclose(l32, r32, rtol=2e-4, atol=1e-5):
        raise AssertionError(f"f32 stft_loss mismatch: pallas={l32} ref={r32}")

    print("KERNEL_OK")
</pallas_src>

<mosaic_0001>
module attributes {stable_mosaic.version = 11 : i64} {
  func.func @kernel(%arg0: i32, %arg1: i32, %arg2: i32, %arg3: memref<136x512xf32, #tpu.memory_space<vmem>>, %arg4: memref<136x512xf32, #tpu.memory_space<vmem>>, %arg5: memref<1x8x512xf32, #tpu.memory_space<vmem>>, %arg6: memref<1x8x512xf32, #tpu.memory_space<vmem>>, %arg7: memref<1x8x512xf32, #tpu.memory_space<vmem>>, %arg8: memref<1x8x512xf32, #tpu.memory_space<vmem>>) attributes {dimension_semantics = [#tpu.dimension_semantics<parallel>, #tpu.dimension_semantics<arbitrary>, #tpu.dimension_semantics<arbitrary>], iteration_bounds = array<i64: 2, 2, 2>, scalar_prefetch = 0 : i64, scratch_operands = 0 : i64, tpu.core_type = #tpu.core_type<tc>, window_params = [{transform_indices = @transform_0, window_bounds = array<i64: 136, 512>}, {transform_indices = @transform_1, window_bounds = array<i64: 136, 512>}, {transform_indices = @transform_2, window_bounds = array<i64: 1, 8, 512>}, {transform_indices = @transform_3, window_bounds = array<i64: 1, 8, 512>}, {transform_indices = @transform_4, window_bounds = array<i64: 1, 8, 512>}, {transform_indices = @transform_5, window_bounds = array<i64: 1, 8, 512>}]} {
    %c0_i32 = arith.constant 0 : i32
    %0 = arith.cmpi eq, %arg1, %c0_i32 : i32
    %c0_i32_0 = arith.constant 0 : i32
    %1 = arith.cmpi eq, %arg2, %c0_i32_0 : i32
    %2 = arith.andi %0, %1 : i1
    %3 = arith.extui %2 : i1 to i32
    %c0_i32_1 = arith.constant 0 : i32
    %4 = arith.cmpi ne, %3, %c0_i32_1 : i32
    scf.if %4 {
      %cst_27 = arith.constant 0.000000e+00 : f32
      %43 = vector.broadcast %cst_27 : f32 to vector<8x512xf32>
      %c0_28 = arith.constant 0 : index
      %c0_29 = arith.constant 0 : index
      %c0_30 = arith.constant 0 : index
      %44 = vector.load %arg5[%c0_28, %c0_29, %c0_30] : memref<1x8x512xf32, #tpu.memory_space<vmem>>, vector<1x8x512xf32>
      %45 = vector.shape_cast %44 : vector<1x8x512xf32> to vector<8x512xf32>
      %46 = vector.shape_cast %43 : vector<8x512xf32> to vector<1x8x512xf32>
      tpu.vector_store %arg5[%c0_28, %c0_29, %c0_30], %46 {strides = array<i32>} : memref<1x8x512xf32, #tpu.memory_space<vmem>>, vector<1x8x512xf32>,
      %cst_31 = arith.constant 0.000000e+00 : f32
      %47 = vector.broadcast %cst_31 : f32 to vector<8x512xf32>
      %c0_32 = arith.constant 0 : index
      %c0_33 = arith.constant 0 : index
      %c0_34 = arith.constant 0 : index
      %48 = vector.load %arg6[%c0_32, %c0_33, %c0_34] : memref<1x8x512xf32, #tpu.memory_space<vmem>>, vector<1x8x512xf32>
      %49 = vector.shape_cast %48 : vector<1x8x512xf32> to vector<8x512xf32>
      %50 = vector.shape_cast %47 : vector<8x512xf32> to vector<1x8x512xf32>
      tpu.vector_store %arg6[%c0_32, %c0_33, %c0_34], %50 {strides = array<i32>} : memref<1x8x512xf32, #tpu.memory_space<vmem>>, vector<1x8x512xf32>,
      %cst_35 = arith.constant 0.000000e+00 : f32
      %51 = vector.broadcast %cst_35 : f32 to vector<8x512xf32>
      %c0_36 = arith.constant 0 : index
      %c0_37 = arith.constant 0 : index
      %c0_38 = arith.constant 0 : index
      %52 = vector.load %arg7[%c0_36, %c0_37, %c0_38] : memref<1x8x512xf32, #tpu.memory_space<vmem>>, vector<1x8x512xf32>
      %53 = vector.shape_cast %52 : vector<1x8x512xf32> to vector<8x512xf32>
      %54 = vector.shape_cast %51 : vector<8x512xf32> to vector<1x8x512xf32>
      tpu.vector_store %arg7[%c0_36, %c0_37, %c0_38], %54 {strides = array<i32>} : memref<1x8x512xf32, #tpu.memory_space<vmem>>, vector<1x8x512xf32>,
      %cst_39 = arith.constant 0.000000e+00 : f32
      %55 = vector.broadcast %cst_39 : f32 to vector<8x512xf32>
      %c0_40 = arith.constant 0 : index
      %c0_41 = arith.constant 0 : index
      %c0_42 = arith.constant 0 : index
      %56 = vector.load %arg8[%c0_40, %c0_41, %c0_42] : memref<1x8x512xf32, #tpu.memory_space<vmem>>, vector<1x8x512xf32>
      %57 = vector.shape_cast %56 : vector<1x8x512xf32> to vector<8x512xf32>
      %58 = vector.shape_cast %55 : vector<8x512xf32> to vector<1x8x512xf32>
      tpu.vector_store %arg8[%c0_40, %c0_41, %c0_42], %58 {strides = array<i32>} : memref<1x8x512xf32, #tpu.memory_space<vmem>>, vector<1x8x512xf32>,
    } else {
    }
    %c2_i32 = arith.constant 2 : i32
    %5 = arith.muli %arg0, %c2_i32 : i32
    %6 = arith.addi %5, %arg1 : i32
    %c136_i32 = arith.constant 136 : i32
    %7 = arith.muli %6, %c136_i32 : i32
    %c530_i32 = arith.constant 530 : i32
    %8 = arith.subi %c530_i32, %7 : i32
    %9 = tpu.iota {dimensions = array<i32: 0>} : vector<8x1xi32>
    %10 = tpu.iota {dimensions = array<i32: 1>} : vector<1x512xi32>
    %c512_i32 = arith.constant 512 : i32
    %11 = arith.muli %arg2, %c512_i32 : i32
    %12 = vector.broadcast %11 : i32 to vector<1x512xi32>
    %13 = arith.addi %12, %10 : vector<1x512xi32>
    %c513_i32 = arith.constant 513 : i32
    %14 = vector.broadcast %c513_i32 : i32 to vector<1x512xi32>
    %15 = arith.cmpi slt, %13, %14 : vector<1x512xi32>
    %cst = arith.constant 0.000000e+00 : f32
    %16 = vector.broadcast %cst : f32 to vector<8x512xf32>
    %c0_i32_2 = arith.constant 0 : i32
    %c17_i32 = arith.constant 17 : i32
    %17 = arith.addi %c0_i32_2, %c17_i32 : i32
    %c1_i32 = arith.constant 1 : i32
    %18:4 = scf.for %arg9 = %c0_i32_2 to %17 step %c1_i32 iter_args(%arg10 = %16, %arg11 = %16, %arg12 = %16, %arg13 = %16) -> (vector<8x512xf32>, vector<8x512xf32>, vector<8x512xf32>, vector<8x512xf32>)  : i32 {
      %c8_i32 = arith.constant 8 : i32
      %43 = arith.muli %arg9, %c8_i32 : i32
      %44 = tpu.assume_multiple %43, 8 : i32
      %45 = vector.broadcast %44 : i32 to vector<8x1xi32>
      %46 = arith.addi %9, %45 : vector<8x1xi32>
      %47 = vector.broadcast %8 : i32 to vector<8x1xi32>
      %48 = arith.cmpi slt, %46, %47 : vector<8x1xi32>
      %49 = vector.broadcast %48 : vector<8x1xi1> to vector<8x512xi1>
      %50 = vector.broadcast %15 : vector<1x512xi1> to vector<8x512xi1>
      %51 = arith.andi %49, %50 : vector<8x512xi1>
      %52 = arith.index_cast %44 : i32 to index
      %c0_27 = arith.constant 0 : index
      %53 = vector.load %arg3[%52, %c0_27] : memref<136x512xf32, #tpu.memory_space<vmem>>, vector<8x512xf32>
      %cst_28 = arith.constant 1.000000e+00 : f32
      %54 = vector.broadcast %cst_28 : f32 to vector<8x512xf32>
      %55 = arith.select %51, %53, %54 : vector<8x512xi1>, vector<8x512xf32>
      %56 = arith.index_cast %44 : i32 to index
      %c0_29 = arith.constant 0 : index
      %57 = vector.load %arg4[%56, %c0_29] : memref<136x512xf32, #tpu.memory_space<vmem>>, vector<8x512xf32>
      %cst_30 = arith.constant 1.000000e+00 : f32
      %58 = vector.broadcast %cst_30 : f32 to vector<8x512xf32>
      %59 = arith.select %51, %57, %58 : vector<8x512xi1>, vector<8x512xf32>
      %60 = arith.subf %59, %55 : vector<8x512xf32>
      %61 = arith.mulf %60, %60 : vector<8x512xf32>
      %62 = arith.addf %arg10, %61 : vector<8x512xf32>
      %63 = arith.mulf %59, %59 : vector<8x512xf32>
      %64 = arith.addf %arg11, %63 : vector<8x512xf32>
      %65 = math.log %55 : vector<8x512xf32>
      %66 = math.log %59 : vector<8x512xf32>
      %67 = arith.subf %65, %66 : vector<8x512xf32>
      %68 = math.absf %67 : vector<8x512xf32>
      %69 = arith.addf %arg12, %68 : vector<8x512xf32>
      %70 = math.absf %60 : vector<8x512xf32>
      %71 = arith.addf %arg13, %70 : vector<8x512xf32>
      scf.yield %62, %64, %69, %71 : vector<8x512xf32>, vector<8x512xf32>, vector<8x512xf32>, vector<8x512xf32>
    }
    %c17_i32_3 = arith.constant 17 : i32
    %c0 = arith.constant 0 : index
    %c0_4 = arith.constant 0 : index
    %c0_5 = arith.constant 0 : index
    %19 = vector.load %arg5[%c0, %c0_4, %c0_5] : memref<1x8x512xf32, #tpu.memory_space<vmem>>, vector<1x8x512xf32>
    %20 = vector.shape_cast %19 : vector<1x8x512xf32> to vector<8x512xf32>
    %21 = arith.addf %20, %18#0 : vector<8x512xf32>
    %c0_6 = arith.constant 0 : index
    %c0_7 = arith.constant 0 : index
    %c0_8 = arith.constant 0 : index
    %22 = vector.load %arg5[%c0_6, %c0_7, %c0_8] : memref<1x8x512xf32, #tpu.memory_space<vmem>>, vector<1x8x512xf32>
    %23 = vector.shape_cast %22 : vector<1x8x512xf32> to vector<8x512xf32>
    %24 = vector.shape_cast %21 : vector<8x512xf32> to vector<1x8x512xf32>
    tpu.vector_store %arg5[%c0_6, %c0_7, %c0_8], %24 {strides = array<i32>} : memref<1x8x512xf32, #tpu.memory_space<vmem>>, vector<1x8x512xf32>,
    %c0_9 = arith.constant 0 : index
    %c0_10 = arith.constant 0 : index
    %c0_11 = arith.constant 0 : index
    %25 = vector.load %arg6[%c0_9, %c0_10, %c0_11] : memref<1x8x512xf32, #tpu.memory_space<vmem>>, vector<1x8x512xf32>
    %26 = vector.shape_cast %25 : vector<1x8x512xf32> to vector<8x512xf32>
    %27 = arith.addf %26, %18#1 : vector<8x512xf32>
    %c0_12 = arith.constant 0 : index
    %c0_13 = arith.constant 0 : index
    %c0_14 = arith.constant 0 : index
    %28 = vector.load %arg6[%c0_12, %c0_13, %c0_14] : memref<1x8x512xf32, #tpu.memory_space<vmem>>, vector<1x8x512xf32>
    %29 = vector.shape_cast %28 : vector<1x8x512xf32> to vector<8x512xf32>
    %30 = vector.shape_cast %27 : vector<8x512xf32> to vector<1x8x512xf32>
    tpu.vector_store %arg6[%c0_12, %c0_13, %c0_14], %30 {strides = array<i32>} : memref<1x8x512xf32, #tpu.memory_space<vmem>>, vector<1x8x512xf32>,
    %c0_15 = arith.constant 0 : index
    %c0_16 = arith.constant 0 : index
    %c0_17 = arith.constant 0 : index
    %31 = vector.load %arg7[%c0_15, %c0_16, %c0_17] : memref<1x8x512xf32, #tpu.memory_space<vmem>>, vector<1x8x512xf32>
    %32 = vector.shape_cast %31 : vector<1x8x512xf32> to vector<8x512xf32>
    %33 = arith.addf %32, %18#2 : vector<8x512xf32>
    %c0_18 = arith.constant 0 : index
    %c0_19 = arith.constant 0 : index
    %c0_20 = arith.constant 0 : index
    %34 = vector.load %arg7[%c0_18, %c0_19, %c0_20] : memref<1x8x512xf32, #tpu.memory_space<vmem>>, vector<1x8x512xf32>
    %35 = vector.shape_cast %34 : vector<1x8x512xf32> to vector<8x512xf32>
    %36 = vector.shape_cast %33 : vector<8x512xf32> to vector<1x8x512xf32>
    tpu.vector_store %arg7[%c0_18, %c0_19, %c0_20], %36 {strides = array<i32>} : memref<1x8x512xf32, #tpu.memory_space<vmem>>, vector<1x8x512xf32>,
    %c0_21 = arith.constant 0 : index
    %c0_22 = arith.constant 0 : index
    %c0_23 = arith.constant 0 : index
    %37 = vector.load %arg8[%c0_21, %c0_22, %c0_23] : memref<1x8x512xf32, #tpu.memory_space<vmem>>, vector<1x8x512xf32>
    %38 = vector.shape_cast %37 : vector<1x8x512xf32> to vector<8x512xf32>
    %39 = arith.addf %38, %18#3 : vector<8x512xf32>
    %c0_24 = arith.constant 0 : index
    %c0_25 = arith.constant 0 : index
    %c0_26 = arith.constant 0 : index
    %40 = vector.load %arg8[%c0_24, %c0_25, %c0_26] : memref<1x8x512xf32, #tpu.memory_space<vmem>>, vector<1x8x512xf32>
    %41 = vector.shape_cast %40 : vector<1x8x512xf32> to vector<8x512xf32>
    %42 = vector.shape_cast %39 : vector<8x512xf32> to vector<1x8x512xf32>
    tpu.vector_store %arg8[%c0_24, %c0_25, %c0_26], %42 {strides = array<i32>} : memref<1x8x512xf32, #tpu.memory_space<vmem>>, vector<1x8x512xf32>,
    return
  }
  func.func @transform_0(%arg0: i32, %arg1: i32, %arg2: i32) -> (i32, i32) {
    %c2_i32 = arith.constant 2 : i32
    %0 = arith.muli %arg0, %c2_i32 : i32
    %1 = arith.addi %0, %arg1 : i32
    %c0_i32 = arith.constant 0 : i32
    return %1, %arg2 : i32, i32
  }
  func.func @transform_1(%arg0: i32, %arg1: i32, %arg2: i32) -> (i32, i32) {
    %c2_i32 = arith.constant 2 : i32
    %0 = arith.muli %arg0, %c2_i32 : i32
    %1 = arith.addi %0, %arg1 : i32
    %c0_i32 = arith.constant 0 : i32
    return %1, %arg2 : i32, i32
  }
  func.func @transform_2(%arg0: i32, %arg1: i32, %arg2: i32) -> (i32, i32, i32) {
    %c0_i32 = arith.constant 0 : i32
    %c0_i32_0 = arith.constant 0 : i32
    %c0_i32_1 = arith.constant 0 : i32
    return %arg0, %c0_i32, %c0_i32_0 : i32, i32, i32
  }
  func.func @transform_3(%arg0: i32, %arg1: i32, %arg2: i32) -> (i32, i32, i32) {
    %c0_i32 = arith.constant 0 : i32
    %c0_i32_0 = arith.constant 0 : i32
    %c0_i32_1 = arith.constant 0 : i32
    return %arg0, %c0_i32, %c0_i32_0 : i32, i32, i32
  }
  func.func @transform_4(%arg0: i32, %arg1: i32, %arg2: i32) -> (i32, i32, i32) {
    %c0_i32 = arith.constant 0 : i32
    %c0_i32_0 = arith.constant 0 : i32
    %c0_i32_1 = arith.constant 0 : i32
    return %arg0, %c0_i32, %c0_i32_0 : i32, i32, i32
  }
  func.func @transform_5(%arg0: i32, %arg1: i32, %arg2: i32) -> (i32, i32, i32) {
    %c0_i32 = arith.constant 0 : i32
    %c0_i32_0 = arith.constant 0 : i32
    %c0_i32_1 = arith.constant 0 : i32
    return %arg0, %c0_i32, %c0_i32_0 : i32, i32, i32
  }
}

</mosaic_0001>

<llo_original>
// kernel: tpu_custom_call.1
$region0: #{tpu_custom_call.1}
  #allocation0 [shape = 'u32[]', space=smem, size = 0x4, offset = 0x4, fixed_abs, tag = 'smem constant byte address 0x4 - core index']
  #allocation1 [shape = 'u32[72,128]{1,0:T(1,128)}', space=vmem, size = 0x9000, scoped, tag = 'internal scratch']
  %s0 = inlined_call_operand.vmem [shape: f32[530,513], index: 0, kind: input, shape index: {}]
  %s1 = inlined_call_operand.vmem [shape: f32[530,513], index: 1, kind: input, shape index: {}]
  %s2 = inlined_call_operand.hbm [shape: f32[2,8,512], index: 2, kind: output, shape index: {0}]
  %s3 = inlined_call_operand.hbm [shape: f32[2,8,512], index: 3, kind: output, shape index: {1}]
  %s4 = inlined_call_operand.hbm [shape: f32[2,8,512], index: 4, kind: output, shape index: {2}]
  %s5 = inlined_call_operand.hbm [shape: f32[2,8,512], index: 5, kind: output, shape index: {3}]
  %6 = xla_tuple %s2, %s3, %s4, %s5
  %s7 = sld [smem:[#allocation0]]
  $region264: #{tpu_custom_call.1} parent=0
    _
  %s9 = ssub.s32 1, %s7
  %s10 = scalar_select 0, %s9, %s7
  $region1: #{tpu_custom_call.1} parent=0
    #allocation2 [shape = 'u8[557056]{0}', space=vmem, size = 0x88000, scoped, tag = 'input window, operand 0']
    #allocation3 [shape = 'u8[557056]{0}', space=vmem, size = 0x88000, scoped, tag = 'input window, operand 1']
    #allocation4 [shape = 'u8[32768]{0}', space=vmem, size = 0x8000, scoped, tag = 'output window, operand 0']
    #allocation5 [shape = 's32[2]{0}', space=sflag, size = 0x8, scoped, tag = 'scoped memory for tpu_custom_call.1']
    #allocation6 [shape = 'u8[32768]{0}', space=vmem, size = 0x8000, scoped, tag = 'output window, operand 1']
    #allocation7 [shape = 's32[2]{0}', space=sflag, size = 0x8, scoped, tag = 'scoped memory for tpu_custom_call.1']
    #allocation8 [shape = 'u8[32768]{0}', space=vmem, size = 0x8000, scoped, tag = 'output window, operand 2']
    #allocation9 [shape = 'u8[32768]{0}', space=vmem, size = 0x8000, scoped, tag = 'output window, operand 3']
    #allocation10 [shape = 's32[2]{0}', space=sflag, size = 0x8, scoped, tag = 'scoped memory for tpu_custom_call.1']
    %11 = vsyncpa [#allocation5], 0
    %s12 = scalar_lea.sflag [#allocation5], 1
    %13 = vsyncpa %s12, 0
    %14 = vsyncpa [#allocation7], 0
    %s15 = scalar_lea.sflag [#allocation7], 1
    %16 = vsyncpa %s15, 0
    %17 = vsyncpa [#allocation10], 0
    %s18 = scalar_lea.sflag [#allocation10], 1
    %19 = vsyncpa %s18, 0
    loop: start=0, step=1, limit=10
    $region2: #{tpu_custom_call.1} parent=1 // loop_pre_header
      _
    $region3: #{tpu_custom_call.1} parent=1 // loop_header
      %s21 = sphi 0, %s25
      %p22 = scmp.ge.s32.totalorder %s21, 10
      %s28 = sphi 0, %s47
      %s29 = sphi 0, %s43
      %s30 = sphi 0, %s39
      %s31 = sphi 0, %s28
      %s32 = sphi 0, %s29
      %s33 = sphi 0, %s30
      %s34 = sphi 0, %s31
      %s35 = sphi 0, %s32
      %s36 = sphi 0, %s33
      %s56 = sphi 0, %s58
      %s59 = sphi 0, %s56
      %s60 = sphi 0, %s59
      %s76 = sphi 0, %s60
      %s88 = sphi 0, %s90
      %s91 = sphi 0, %s88
      %s92 = sphi 0, %s91
      %s108 = sphi 0, %s92
      %s114 = sphi 0, %s116
      %s117 = sphi 0, %s114
      %s118 = sphi 0, %s117
      %s134 = sphi 0, %s118
      %s140 = sphi 0, %s142
      %s143 = sphi 0, %s140
      %s144 = sphi 0, %s143
      %s160 = sphi 0, %s144
      %s166 = sphi 0, %s168
      %s169 = sphi 0, %s166
      %s170 = sphi 0, %s169
      %s186 = sphi 0, %s170
      %s192 = sphi 0, %s194
      %s195 = sphi 0, %s192
      %s196 = sphi 0, %s195
      %s212 = sphi 0, %s196
    $region4: #{tpu_custom_call.1} parent=1 // loop_header_branch
      %24 = sbr.rel (%p22) target = $region8
    $region5: #{tpu_custom_call.1} parent=1 // loop_body
      %s26 = ssub.s32 %s21, 1
      %s27 = ssub.s32 %s21, 2
      %s37 = sadd.s32 1, %s30
      %p38 = scmp.ge.s32.totalorder %s37, 2
      %s39 = scalar_select %p38, 0, %s37
      %s40 = sadd.s32 1, %s29
      %s41 = scalar_select %p38, %s40, %s29
      %p42 = scmp.ge.s32.totalorder %s41, 2
      %s43 = scalar_select %p42, 0, %s41
      %s44 = sadd.s32 1, %s28
      %s45 = scalar_select %p42, %s44, %s28
      %p46 = scmp.ge.s32.totalorder %s45, 2
      %s47 = scalar_select %p46, 0, %s45
      %s48 = smul.u32 %s28, 2
      %s49 = sadd.s32 %s48, %s29
      %s50 = smul.u32 %s47, 2
      %s51 = sadd.s32 %s50, %s43
      %s52 = ssub.s32 %s49, %s51
      %s53 = ssub.s32 %s30, %s39
      %s54 = sor.u32 %s52, %s53
      %p55 = scmp.eq.s32.totalorder %s54, 0
      %s57 = sadd.s32 %s56, 1
      %s58 = scalar_select %p55, %s56, %s57
      %p61 = pneg %p55
      %p62 = scmp.eq.s32.totalorder %s21, 7
      %p63 = por %p61, %p62
      %p64 = scmp.ne.s32.totalorder %s56, %s59
      %p65 = scmp.eq.s32.totalorder %s21, 0
      %p66 = por %p64, %p65
      %p67 = scmp.ne.s32.totalorder %s56, %s59
      %p68 = scmp.eq.s32.totalorder %s26, 7
      %p69 = por %p67, %p68
      %p70 = scmp.ne.s32.totalorder %s59, %s60
      %p71 = scmp.eq.s32.totalorder %s26, 0
      %p72 = por %p70, %p71
      %p73 = scmp.ne.s32.totalorder %s59, %s60
      %p74 = scmp.eq.s32.totalorder %s27, 7
      %p75 = por %p73, %p74
      %p77 = scmp.ne.s32.totalorder %s60, %s76
      %p78 = scmp.eq.s32.totalorder %s27, 0
      %p79 = por %p77, %p78
      %s80 = smul.u32 %s28, 2
      %s81 = sadd.s32 %s80, %s29
      %s82 = smul.u32 %s47, 2
      %s83 = sadd.s32 %s82, %s43
      %s84 = ssub.s32 %s81, %s83
      %s85 = ssub.s32 %s30, %s39
      %s86 = sor.u32 %s84, %s85
      %p87 = scmp.eq.s32.totalorder %s86, 0
      %s89 = sadd.s32 %s88, 1
      %s90 = scalar_select %p87, %s88, %s89
      %p93 = pneg %p87
      %p94 = scmp.eq.s32.totalorder %s21, 7
      %p95 = por %p93, %p94
      %p96 = scmp.ne.s32.totalorder %s88, %s91
      %p97 = scmp.eq.s32.totalorder %s21, 0
      %p98 = por %p96, %p97
      %p99 = scmp.ne.s32.totalorder %s88, %s91
      %p100 = scmp.eq.s32.totalorder %s26, 7
      %p101 = por %p99, %p100
      %p102 = scmp.ne.s32.totalorder %s91, %s92
      %p103 = scmp.eq.s32.totalorder %s26, 0
      %p104 = por %p102, %p103
      %p105 = scmp.ne.s32.totalorder %s91, %s92
      %p106 = scmp.eq.s32.totalorder %s27, 7
      %p107 = por %p105, %p106
      %p109 = scmp.ne.s32.totalorder %s92, %s108
      %p110 = scmp.eq.s32.totalorder %s27, 0
      %p111 = por %p109, %p110
      %s112 = ssub.s32 %s28, %s47
      %p113 = scmp.eq.s32.totalorder %s112, 0
      %s115 = sadd.s32 %s114, 1
      %s116 = scalar_select %p113, %s114, %s115
      %p119 = pneg %p113
      %p120 = scmp.eq.s32.totalorder %s21, 7
      %p121 = por %p119, %p120
      %p122 = scmp.ne.s32.totalorder %s114, %s117
      %p123 = scmp.eq.s32.totalorder %s21, 0
      %p124 = por %p122, %p123
      %p125 = scmp.ne.s32.totalorder %s114, %s117
      %p126 = scmp.eq.s32.totalorder %s26, 7
      %p127 = por %p125, %p126
      %p128 = scmp.ne.s32.totalorder %s117, %s118
      %p129 = scmp.eq.s32.totalorder %s26, 0
      %p130 = por %p128, %p129
      %p131 = scmp.ne.s32.totalorder %s117, %s118
      %p132 = scmp.eq.s32.totalorder %s27, 7
      %p133 = por %p131, %p132
      %p135 = scmp.ne.s32.totalorder %s118, %s134
      %p136 = scmp.eq.s32.totalorder %s27, 0
      %p137 = por %p135, %p136
      %s138 = ssub.s32 %s28, %s47
      %p139 = scmp.eq.s32.totalorder %s138, 0
      %s141 = sadd.s32 %s140, 1
      %s142 = scalar_select %p139, %s140, %s141
      %p145 = pneg %p139
      %p146 = scmp.eq.s32.totalorder %s21, 7
      %p147 = por %p145, %p146
      %p148 = scmp.ne.s32.totalorder %s140, %s143
      %p149 = scmp.eq.s32.totalorder %s21, 0
      %p150 = por %p148, %p149
      %p151 = scmp.ne.s32.totalorder %s140, %s143
      %p152 = scmp.eq.s32.totalorder %s26, 7
      %p153 = por %p151, %p152
      %p154 = scmp.ne.s32.totalorder %s143, %s144
      %p155 = scmp.eq.s32.totalorder %s26, 0
      %p156 = por %p154, %p155
      %p157 = scmp.ne.s32.totalorder %s143, %s144
      %p158 = scmp.eq.s32.totalorder %s27, 7
      %p159 = por %p157, %p158
      %p161 = scmp.ne.s32.totalorder %s144, %s160
      %p162 = scmp.eq.s32.totalorder %s27, 0
      %p163 = por %p161, %p162
      %s164 = ssub.s32 %s28, %s47
      %p165 = scmp.eq.s32.totalorder %s164, 0
      %s167 = sadd.s32 %s166, 1
      %s168 = scalar_select %p165, %s166, %s167
      %p171 = pneg %p165
      %p172 = scmp.eq.s32.totalorder %s21, 7
      %p173 = por %p171, %p172
      %p174 = scmp.ne.s32.totalorder %s166, %s169
      %p175 = scmp.eq.s32.totalorder %s21, 0
      %p176 = por %p174, %p175
      %p177 = scmp.ne.s32.totalorder %s166, %s169
      %p178 = scmp.eq.s32.totalorder %s26, 7
      %p179 = por %p177, %p178
      %p180 = scmp.ne.s32.totalorder %s169, %s170
      %p181 = scmp.eq.s32.totalorder %s26, 0
      %p182 = por %p180, %p181
      %p183 = scmp.ne.s32.totalorder %s169, %s170
      %p184 = scmp.eq.s32.totalorder %s27, 7
      %p185 = por %p183, %p184
      %p187 = scmp.ne.s32.totalorder %s170, %s186
      %p188 = scmp.eq.s32.totalorder %s27, 0
      %p189 = por %p187, %p188
      %s190 = ssub.s32 %s28, %s47
      %p191 = scmp.eq.s32.totalorder %s190, 0
      %s193 = sadd.s32 %s192, 1
      %s194 = scalar_select %p191, %s192, %s193
      %p197 = pneg %p191
      %p198 = scmp.eq.s32.totalorder %s21, 7
      %p199 = por %p197, %p198
      %p200 = scmp.ne.s32.totalorder %s192, %s195
      %p201 = scmp.eq.s32.totalorder %s21, 0
      %p202 = por %p200, %p201
      %p203 = scmp.ne.s32.totalorder %s192, %s195
      %p204 = scmp.eq.s32.totalorder %s26, 7
      %p205 = por %p203, %p204
      %p206 = scmp.ne.s32.totalorder %s195, %s196
      %p207 = scmp.eq.s32.totalorder %s26, 0
      %p208 = por %p206, %p207
      %p209 = scmp.ne.s32.totalorder %s195, %s196
      %p210 = scmp.eq.s32.totalorder %s27, 7
      %p211 = por %p209, %p210
      %p213 = scmp.ne.s32.totalorder %s196, %s212
      %p214 = scmp.eq.s32.totalorder %s27, 0
      %p215 = por %p213, %p214
      %p216 = scmp.le.s32.totalorder 1, %s21
      %p217 = scmp.lt.s32.totalorder %s21, 9
      %p218 = pnand %p216, %p217
      %p219 = pneg %p218
      // Predicated region
      $region9: #{tpu_custom_call.1} parent=5 // pred_check
        _
      $region10: #{tpu_custom_call.1} parent=5 // pred_check_branch
        %221 = sbr.rel (%p218) target = $region12
      $region11: #{tpu_custom_call.1} parent=5 // pred_region
        %s222 = ssub.s32 %s21, 1
      $region12: #{tpu_custom_call.1} parent=5 // pred_fallthru
        _
      %p223 = scmp.lt.s32.totalorder %s21, 8
      // Predicated region
      $region13: #{tpu_custom_call.1} parent=5 // pred_check
        %p224 = pneg %p223
      $region14: #{tpu_custom_call.1} parent=5 // pred_check_branch
        %226 = sbr.rel (%p224) target = $region16
      $region15: #{tpu_custom_call.1} parent=5 // pred_region
        // Predicated region
        $region17: #{tpu_custom_call.1} parent=15 // pred_check
          %p227 = pneg %p66
        $region18: #{tpu_custom_call.1} parent=15 // pred_check_branch
          %229 = sbr.rel (%p227) target = $region20
        $region19: #{tpu_custom_call.1} parent=15 // pred_region
          %s230 = sand.u32 %s56, 1
          %s231 = sand.u32 %s56, 1
          %s232 = smul.addr %s231, 544
          %s233 = scalar_lea.vmem [#allocation2], %s232
          %s234 = smul.u32 %s28, 2
          %s235 = sadd.s32 %s234, %s29
          %s236 = smul.u32 17, %s235
          %s237 = smul.u32 4, %s30
          %s238 = ssub.s32 67, %s236
          %p239 = scmp.lt.s32.totalorder %s238, 17
          %s240 = scalar_select %p239, %s238, 17
          %s241 = smul.u32 8, %s240
          %s242 = ssub.s32 5, %s237
          %p243 = scmp.lt.s32.totalorder %s242, 4
          %s244 = scalar_select %p243, %s242, 4
          %s245 = smul.u32 %s241, %s244
          %p246 = scmp.ne.s32.totalorder 0, %s245
          %s247 = smul.addr %s236, 5
          %s248 = sadd.s32 %s237, %s247
          %s249 = smul.addr %s248, 8
          %s250 = scalar_lea.vmem %s0, %s249
          %s251 = smul.u32 %s244, 8
          // Predicated region
          $region21: #{tpu_custom_call.1} parent=19 // pred_check
            %p252 = pneg %p246
          $region22: #{tpu_custom_call.1} parent=19 // pred_check_branch
            %254 = sbr.rel (%p252) target = $region24
          $region23: #{tpu_custom_call.1} parent=19 // pred_region
            %p255 = scmp.lt.u32.totalorder %s251, 8
            %p256 = pneg %p255
            // Predicated region
            $region25: #{tpu_custom_call.1} parent=23 // pred_check
              _
            $region26: #{tpu_custom_call.1} parent=23 // pred_check_branch
              %258 = sbr.rel (%p255) target = $region28
            $region27: #{tpu_custom_call.1} parent=23 // pred_region
              %s341 = sand.u32 %s251, 7
              %p342 = scmp.eq.s32.totalorder %s341, 0
              // Predicated region
              $region47: #{tpu_custom_call.1} parent=27 // pred_check
                %p343 = pneg %p342
              $region48: #{tpu_custom_call.1} parent=27 // pred_check_branch
                %345 = sbr.rel (%p343) target = $region50
              $region49: #{tpu_custom_call.1} parent=27 // pred_region
                %s346 = sshrl.u32 %s251, 3
                %s347 = sshrl.u32 %s240, 4
                %s348 = sshrl.u32 %s346, 1
                %s349 = smul.u32 %s347, %s348
                // While loop
                $region51: #{tpu_custom_call.1} parent=49 // loop_pre_header
                  _
                $region52: #{tpu_custom_call.1} parent=49 // loop_header
                  %s351 = sphi 0, %s353
                  %p352 = scmp.ge.s32.totalorder %s351, %s349
                  %s356 = sphi 0, %s430
                  %s357 = sphi 0, %s426
                  %s358 = sphi %s250, %s437
                  %s359 = sphi %s233, %s438
                $region53: #{tpu_custom_call.1} parent=49 // loop_header_branch
                  %355 = sbr.rel (%p352) target = $region57
                $region54: #{tpu_custom_call.1} parent=49 // loop_body
                  %v360 = vld [vmem:[%s358] sm:$0xff]
                  %361 = vst [vmem:[%s359] sm:$0xff] %v360
                  %v362 = vld [vmem:[%s358 + $0x8] sm:$0xff]
                  %363 = vst [vmem:[%s359 + $0x8] sm:$0xff] %v362
                  %v364 = vld [vmem:[%s358 + $0x28] sm:$0xff]
                  %365 = vst [vmem:[%s359 + $0x20] sm:$0xff] %v364
                  %v366 = vld [vmem:[%s358 + $0x30] sm:$0xff]
                  %367 = vst [vmem:[%s359 + $0x28] sm:$0xff] %v366
                  %v368 = vld [vmem:[%s358 + $0x50] sm:$0xff]
                  %369 = vst [vmem:[%s359 + $0x40] sm:$0xff] %v368
                  %v370 = vld [vmem:[%s358 + $0x58] sm:$0xff]
                  %371 = vst [vmem:[%s359 + $0x48] sm:$0xff] %v370
                  %v372 = vld [vmem:[%s358 + $0x78] sm:$0xff]
                  %373 = vst [vmem:[%s359 + $0x60] sm:$0xff] %v372
                  %v374 = vld [vmem:[%s358 + $0x80] sm:$0xff]
                  %375 = vst [vmem:[%s359 + $0x68] sm:$0xff] %v374
                  %v376 = vld [vmem:[%s358 + $0xa0] sm:$0xff]
                  %377 = vst [vmem:[%s359 + $0x80] sm:$0xff] %v376
                  %v378 = vld [vmem:[%s358 + $0xa8] sm:$0xff]
                  %379 = vst [vmem:[%s359 + $0x88] sm:$0xff] %v378
                  %v380 = vld [vmem:[%s358 + $0xc8] sm:$0xff]
                  %381 = vst [vmem:[%s359 + $0xa0] sm:$0xff] %v380
                  %v382 = vld [vmem:[%s358 + $0xd0] sm:$0xff]
                  %383 = vst [vmem:[%s359 + $0xa8] sm:$0xff] %v382
                  %v384 = vld [vmem:[%s358 + $0xf0] sm:$0xff]
                  %385 = vst [vmem:[%s359 + $0xc0] sm:$0xff] %v384
                  %v386 = vld [vmem:[%s358 + $0xf8] sm:$0xff]
                  %387 = vst [vmem:[%s359 + $0xc8] sm:$0xff] %v386
                  %v388 = vld [vmem:[%s358 + $0x118] sm:$0xff]
                  %389 = vst [vmem:[%s359 + $0xe0] sm:$0xff] %v388
                  %v390 = vld [vmem:[%s358 + $0x120] sm:$0xff]
                  %391 = vst [vmem:[%s359 + $0xe8] sm:$0xff] %v390
                  %v392 = vld [vmem:[%s358 + $0x140] sm:$0xff]
                  %393 = vst [vmem:[%s359 + $0x100] sm:$0xff] %v392
                  %v394 = vld [vmem:[%s358 + $0x148] sm:$0xff]
                  %395 = vst [vmem:[%s359 + $0x108] sm:$0xff] %v394
                  %v396 = vld [vmem:[%s358 + $0x168] sm:$0xff]
                  %397 = vst [vmem:[%s359 + $0x120] sm:$0xff] %v396
                  %v398 = vld [vmem:[%s358 + $0x170] sm:$0xff]
                  %399 = vst [vmem:[%s359 + $0x128] sm:$0xff] %v398
                  %v400 = vld [vmem:[%s358 + $0x190] sm:$0xff]
                  %401 = vst [vmem:[%s359 + $0x140] sm:$0xff] %v400
                  %v402 = vld [vmem:[%s358 + $0x198] sm:$0xff]
                  %403 = vst [vmem:[%s359 + $0x148] sm:$0xff] %v402
                  %v404 = vld [vmem:[%s358 + $0x1b8] sm:$0xff]
                  %405 = vst [vmem:[%s359 + $0x160] sm:$0xff] %v404
                  %v406 = vld [vmem:[%s358 + $0x1c0] sm:$0xff]
                  %407 = vst [vmem:[%s359 + $0x168] sm:$0xff] %v406
                  %v408 = vld [vmem:[%s358 + $0x1e0] sm:$0xff]
                  %409 = vst [vmem:[%s359 + $0x180] sm:$0xff] %v408
                  %v410 = vld [vmem:[%s358 + $0x1e8] sm:$0xff]
                  %411 = vst [vmem:[%s359 + $0x188] sm:$0xff] %v410
                  %v412 = vld [vmem:[%s358 + $0x208] sm:$0xff]
                  %413 = vst [vmem:[%s359 + $0x1a0] sm:$0xff] %v412
                  %v414 = vld [vmem:[%s358 + $0x210] sm:$0xff]
                  %415 = vst [vmem:[%s359 + $0x1a8] sm:$0xff] %v414
                  %v416 = vld [vmem:[%s358 + $0x230] sm:$0xff]
                  %417 = vst [vmem:[%s359 + $0x1c0] sm:$0xff] %v416
                  %v418 = vld [vmem:[%s358 + $0x238] sm:$0xff]
                  %419 = vst [vmem:[%s359 + $0x1c8] sm:$0xff] %v418
                  %v420 = vld [vmem:[%s358 + $0x258] sm:$0xff]
                  %421 = vst [vmem:[%s359 + $0x1e0] sm:$0xff] %v420
                  %v422 = vld [vmem:[%s358 + $0x260] sm:$0xff]
                  %423 = vst [vmem:[%s359 + $0x1e8] sm:$0xff] %v422
                  %s424 = sadd.s32 1, %s357
                  %p425 = scmp.ge.s32.totalorder %s424, %s348
                  %s426 = scalar_select %p425, 0, %s424
                  %s427 = sadd.s32 1, %s356
                  %s428 = scalar_select %p425, %s427, %s356
                  %p429 = scmp.ge.s32.totalorder %s428, %s347
                  %s430 = scalar_select %p429, 0, %s428
                  %s431 = smul.u32 %s430, 640
                  %s432 = smul.u32 %s426, 16
                  %s433 = sadd.s32 %s431, %s432
                  %s434 = smul.u32 %s430, 512
                  %s435 = smul.u32 %s426, 16
                  %s436 = sadd.s32 %s434, %s435
                  %s437 = scalar_lea.vmem %s250, %s433
                  %s438 = scalar_lea.vmem %s233, %s436 [#allocation2]
                $region55: #{tpu_custom_call.1} parent=49 // loop_footer
                  %s353 = sadd.s32 %s351, 1
                $region56: #{tpu_custom_call.1} parent=49 // loop_footer_branch
                  %350 = sbr.rel target = $region52
                $region57: #{tpu_custom_call.1} parent=49 // loop_exit
                  _
                %s439 = sshrl.u32 %s346, 1
                %s440 = sshrl.u32 %s240, 4
                %s441 = sand.u32 %s240, 15
                %s442 = smul.u32 %s440, 16
                %s443 = smul.u32 40, %s442
                %s444 = scalar_lea.vmem %s250, %s443
                %s445 = smul.u32 32, %s442
                %s446 = scalar_lea.vmem %s233, %s445 [#allocation2]
                %s447 = smul.u32 %s441, %s439
                // While loop
                $region58: #{tpu_custom_call.1} parent=49 // loop_pre_header
                  _
                $region59: #{tpu_custom_call.1} parent=49 // loop_header
                  %s449 = sphi 0, %s451
                  %p450 = scmp.ge.s32.totalorder %s449, %s447
                  %s454 = sphi 0, %s468
                  %s455 = sphi 0, %s464
                  %s456 = sphi %s444, %s475
                  %s457 = sphi %s446, %s476
                $region60: #{tpu_custom_call.1} parent=49 // loop_header_branch
                  %453 = sbr.rel (%p450) target = $region64
                $region61: #{tpu_custom_call.1} parent=49 // loop_body
                  %v458 = vld [vmem:[%s456] sm:$0xff]
                  %459 = vst [vmem:[%s457] sm:$0xff] %v458
                  %v460 = vld [vmem:[%s456 + $0x8] sm:$0xff]
                  %461 = vst [vmem:[%s457 + $0x8] sm:$0xff] %v460
                  %s462 = sadd.s32 1, %s455
                  %p463 = scmp.ge.s32.totalorder %s462, %s439
                  %s464 = scalar_select %p463, 0, %s462
                  %s465 = sadd.s32 1, %s454
                  %s466 = scalar_select %p463, %s465, %s454
                  %p467 = scmp.ge.s32.totalorder %s466, %s441
                  %s468 = scalar_select %p467, 0, %s466
                  %s469 = smul.u32 %s468, 40
                  %s470 = smul.u32 %s464, 16
                  %s471 = sadd.s32 %s469, %s470
                  %s472 = smul.u32 %s468, 32
                  %s473 = smul.u32 %s464, 16
                  %s474 = sadd.s32 %s472, %s473
                  %s475 = scalar_lea.vmem %s444, %s471
                  %s476 = scalar_lea.vmem %s446, %s474 [#allocation2]
                $region62: #{tpu_custom_call.1} parent=49 // loop_footer
                  %s451 = sadd.s32 %s449, 1
                $region63: #{tpu_custom_call.1} parent=49 // loop_footer_branch
                  %448 = sbr.rel target = $region59
                $region64: #{tpu_custom_call.1} parent=49 // loop_exit
                  _
                %s477 = sshrl.u32 %s346, 1
                %s478 = sand.u32 %s346, 1
                %s479 = smul.u32 %s477, 2
                %s480 = smul.u32 8, %s479
                %s481 = scalar_lea.vmem %s250, %s480
                %s482 = smul.u32 8, %s479
                %s483 = scalar_lea.vmem %s233, %s482 [#allocation2]
                %s484 = smul.u32 %s240, %s478
                // While loop
                $region65: #{tpu_custom_call.1} parent=49 // loop_pre_header
                  _
                $region66: #{tpu_custom_call.1} parent=49 // loop_header
                  %s486 = sphi 0, %s488
                  %p487 = scmp.ge.s32.totalorder %s486, %s484
                  %s491 = sphi 0, %s503
                  %s492 = sphi 0, %s499
                  %s493 = sphi %s481, %s510
                  %s494 = sphi %s483, %s511
                $region67: #{tpu_custom_call.1} parent=49 // loop_header_branch
                  %490 = sbr.rel (%p487) target = $region71
                $region68: #{tpu_custom_call.1} parent=49 // loop_body
                  %v495 = vld [vmem:[%s493] sm:$0xff]
                  %496 = vst [vmem:[%s494] sm:$0xff] %v495
                  %s497 = sadd.s32 1, %s492
                  %p498 = scmp.ge.s32.totalorder %s497, %s478
                  %s499 = scalar_select %p498, 0, %s497
                  %s500 = sadd.s32 1, %s491
                  %s501 = scalar_select %p498, %s500, %s491
                  %p502 = scmp.ge.s32.totalorder %s501, %s240
                  %s503 = scalar_select %p502, 0, %s501
                  %s504 = smul.u32 %s503, 40
                  %s505 = smul.u32 %s499, 8
                  %s506 = sadd.s32 %s504, %s505
                  %s507 = smul.u32 %s503, 32
                  %s508 = smul.u32 %s499, 8
                  %s509 = sadd.s32 %s507, %s508
                  %s510 = scalar_lea.vmem %s481, %s506
                  %s511 = scalar_lea.vmem %s483, %s509 [#allocation2]
                $region69: #{tpu_custom_call.1} parent=49 // loop_footer
                  %s488 = sadd.s32 %s486, 1
                $region70: #{tpu_custom_call.1} parent=49 // loop_footer_branch
                  %485 = sbr.rel target = $region66
                $region71: #{tpu_custom_call.1} parent=49 // loop_exit
                  _
              $region50: #{tpu_custom_call.1} parent=27 // pred_fallthru
                _
              %p512 = pneg %p342
              // Predicated region
              $region72: #{tpu_custom_call.1} parent=27 // pred_check
                _
              $region73: #{tpu_custom_call.1} parent=27 // pred_check_branch
                %514 = sbr.rel (%p342) target = $region75
              $region74: #{tpu_custom_call.1} parent=27 // pred_region
                %s515 = sand.u32 %s251, 7
                %s516 = ssub.s32 %s251, %s515
                %s517 = scalar_lea.vmem %s250, %s516
                %s518 = ssub.s32 %s251, %s515
                %s519 = scalar_lea.vmem %s233, %s518 [#allocation2]
                %s520 = sshrl.u32 %s251, 3
                %s521 = sshrl.u32 %s240, 4
                %s522 = sshrl.u32 %s520, 1
                %s523 = smul.u32 %s521, %s522
                // While loop
                $region76: #{tpu_custom_call.1} parent=74 // loop_pre_header
                  _
                $region77: #{tpu_custom_call.1} parent=74 // loop_header
                  %s525 = sphi 0, %s527
                  %p526 = scmp.ge.s32.totalorder %s525, %s523
                  %s530 = sphi 0, %s604
                  %s531 = sphi 0, %s600
                  %s532 = sphi %s250, %s611
                  %s533 = sphi %s233, %s612
                $region78: #{tpu_custom_call.1} parent=74 // loop_header_branch
                  %529 = sbr.rel (%p526) target = $region82
                $region79: #{tpu_custom_call.1} parent=74 // loop_body
                  %v534 = vld [vmem:[%s532] sm:$0xff]
                  %535 = vst [vmem:[%s533] sm:$0xff] %v534
                  %v536 = vld [vmem:[%s532 + $0x8] sm:$0xff]
                  %537 = vst [vmem:[%s533 + $0x8] sm:$0xff] %v536
                  %v538 = vld [vmem:[%s532 + $0x28] sm:$0xff]
                  %539 = vst [vmem:[%s533 + $0x20] sm:$0xff] %v538
                  %v540 = vld [vmem:[%s532 + $0x30] sm:$0xff]
                  %541 = vst [vmem:[%s533 + $0x28] sm:$0xff] %v540
                  %v542 = vld [vmem:[%s532 + $0x50] sm:$0xff]
                  %543 = vst [vmem:[%s533 + $0x40] sm:$0xff] %v542
                  %v544 = vld [vmem:[%s532 + $0x58] sm:$0xff]
                  %545 = vst [vmem:[%s533 + $0x48] sm:$0xff] %v544
                  %v546 = vld [vmem:[%s532 + $0x78] sm:$0xff]
                  %547 = vst [vmem:[%s533 + $0x60] sm:$0xff] %v546
                  %v548 = vld [vmem:[%s532 + $0x80] sm:$0xff]
                  %549 = vst [vmem:[%s533 + $0x68] sm:$0xff] %v548
                  %v550 = vld [vmem:[%s532 + $0xa0] sm:$0xff]
                  %551 = vst [vmem:[%s533 + $0x80] sm:$0xff] %v550
                  %v552 = vld [vmem:[%s532 + $0xa8] sm:$0xff]
                  %553 = vst [vmem:[%s533 + $0x88] sm:$0xff] %v552
                  %v554 = vld [vmem:[%s532 + $0xc8] sm:$0xff]
                  %555 = vst [vmem:[%s533 + $0xa0] sm:$0xff] %v554
                  %v556 = vld [vmem:[%s532 + $0xd0] sm:$0xff]
                  %557 = vst [vmem:[%s533 + $0xa8] sm:$0xff] %v556
                  %v558 = vld [vmem:[%s532 + $0xf0] sm:$0xff]
                  %559 = vst [vmem:[%s533 + $0xc0] sm:$0xff] %v558
                  %v560 = vld [vmem:[%s532 + $0xf8] sm:$0xff]
                  %561 = vst [vmem:[%s533 + $0xc8] sm:$0xff] %v560
                  %v562 = vld [vmem:[%s532 + $0x118] sm:$0xff]
                  %563 = vst [vmem:[%s533 + $0xe0] sm:$0xff] %v562
                  %v564 = vld [vmem:[%s532 + $0x120] sm:$0xff]
                  %565 = vst [vmem:[%s533 + $0xe8] sm:$0xff] %v564
                  %v566 = vld [vmem:[%s532 + $0x140] sm:$0xff]
                  %567 = vst [vmem:[%s533 + $0x100] sm:$0xff] %v566
                  %v568 = vld [vmem:[%s532 + $0x148] sm:$0xff]
                  %569 = vst [vmem:[%s533 + $0x108] sm:$0xff] %v568
                  %v570 = vld [vmem:[%s532 + $0x168] sm:$0xff]
                  %571 = vst [vmem:[%s533 + $0x120] sm:$0xff] %v570
                  %v572 = vld [vmem:[%s532 + $0x170] sm:$0xff]
                  %573 = vst [vmem:[%s533 + $0x128] sm:$0xff] %v572
                  %v574 = vld [vmem:[%s532 + $0x190] sm:$0xff]
                  %575 = vst [vmem:[%s533 + $0x140] sm:$0xff] %v574
                  %v576 = vld [vmem:[%s532 + $0x198] sm:$0xff]
                  %577 = vst [vmem:[%s533 + $0x148] sm:$0xff] %v576
                  %v578 = vld [vmem:[%s532 + $0x1b8] sm:$0xff]
                  %579 = vst [vmem:[%s533 + $0x160] sm:$0xff] %v578
                  %v580 = vld [vmem:[%s532 + $0x1c0] sm:$0xff]
                  %581 = vst [vmem:[%s533 + $0x168] sm:$0xff] %v580
                  %v582 = vld [vmem:[%s532 + $0x1e0] sm:$0xff]
                  %583 = vst [vmem:[%s533 + $0x180] sm:$0xff] %v582
                  %v584 = vld [vmem:[%s532 + $0x1e8] sm:$0xff]
                  %585 = vst [vmem:[%s533 + $0x188] sm:$0xff] %v584
                  %v586 = vld [vmem:[%s532 + $0x208] sm:$0xff]
                  %587 = vst [vmem:[%s533 + $0x1a0] sm:$0xff] %v586
                  %v588 = vld [vmem:[%s532 + $0x210] sm:$0xff]
                  %589 = vst [vmem:[%s533 + $0x1a8] sm:$0xff] %v588
                  %v590 = vld [vmem:[%s532 + $0x230] sm:$0xff]
                  %591 = vst [vmem:[%s533 + $0x1c0] sm:$0xff] %v590
                  %v592 = vld [vmem:[%s532 + $0x238] sm:$0xff]
                  %593 = vst [vmem:[%s533 + $0x1c8] sm:$0xff] %v592
                  %v594 = vld [vmem:[%s532 + $0x258] sm:$0xff]
                  %595 = vst [vmem:[%s533 + $0x1e0] sm:$0xff] %v594
                  %v596 = vld [vmem:[%s532 + $0x260] sm:$0xff]
                  %597 = vst [vmem:[%s533 + $0x1e8] sm:$0xff] %v596
                  %s598 = sadd.s32 1, %s531
                  %p599 = scmp.ge.s32.totalorder %s598, %s522
                  %s600 = scalar_select %p599, 0, %s598
                  %s601 = sadd.s32 1, %s530
                  %s602 = scalar_select %p599, %s601, %s530
                  %p603 = scmp.ge.s32.totalorder %s602, %s521
                  %s604 = scalar_select %p603, 0, %s602
                  %s605 = smul.u32 %s604, 640
                  %s606 = smul.u32 %s600, 16
                  %s607 = sadd.s32 %s605, %s606
                  %s608 = smul.u32 %s604, 512
                  %s609 = smul.u32 %s600, 16
                  %s610 = sadd.s32 %s608, %s609
                  %s611 = scalar_lea.vmem %s250, %s607
                  %s612 = scalar_lea.vmem %s233, %s610 [#allocation2]
                $region80: #{tpu_custom_call.1} parent=74 // loop_footer
                  %s527 = sadd.s32 %s525, 1
                $region81: #{tpu_custom_call.1} parent=74 // loop_footer_branch
                  %524 = sbr.rel target = $region77
                $region82: #{tpu_custom_call.1} parent=74 // loop_exit
                  _
                %s613 = sshrl.u32 %s520, 1
                %s614 = sshrl.u32 %s240, 4
                %s615 = sand.u32 %s240, 15
                %s616 = smul.u32 %s614, 16
                %s617 = smul.u32 40, %s616
                %s618 = scalar_lea.vmem %s250, %s617
                %s619 = smul.u32 32, %s616
                %s620 = scalar_lea.vmem %s233, %s619 [#allocation2]
                %s621 = smul.u32 %s615, %s613
                // While loop
                $region83: #{tpu_custom_call.1} parent=74 // loop_pre_header
                  _
                $region84: #{tpu_custom_call.1} parent=74 // loop_header
                  %s623 = sphi 0, %s625
                  %p624 = scmp.ge.s32.totalorder %s623, %s621
                  %s628 = sphi 0, %s642
                  %s629 = sphi 0, %s638
                  %s630 = sphi %s618, %s649
                  %s631 = sphi %s620, %s650
                $region85: #{tpu_custom_call.1} parent=74 // loop_header_branch
                  %627 = sbr.rel (%p624) target = $region89
                $region86: #{tpu_custom_call.1} parent=74 // loop_body
                  %v632 = vld [vmem:[%s630] sm:$0xff]
                  %633 = vst [vmem:[%s631] sm:$0xff] %v632
                  %v634 = vld [vmem:[%s630 + $0x8] sm:$0xff]
                  %635 = vst [vmem:[%s631 + $0x8] sm:$0xff] %v634
                  %s636 = sadd.s32 1, %s629
                  %p637 = scmp.ge.s32.totalorder %s636, %s613
                  %s638 = scalar_select %p637, 0, %s636
                  %s639 = sadd.s32 1, %s628
                  %s640 = scalar_select %p637, %s639, %s628
                  %p641 = scmp.ge.s32.totalorder %s640, %s615
                  %s642 = scalar_select %p641, 0, %s640
                  %s643 = smul.u32 %s642, 40
                  %s644 = smul.u32 %s638, 16
                  %s645 = sadd.s32 %s643, %s644
                  %s646 = smul.u32 %s642, 32
                  %s647 = smul.u32 %s638, 16
                  %s648 = sadd.s32 %s646, %s647
                  %s649 = scalar_lea.vmem %s618, %s645
                  %s650 = scalar_lea.vmem %s620, %s648 [#allocation2]
                $region87: #{tpu_custom_call.1} parent=74 // loop_footer
                  %s625 = sadd.s32 %s623, 1
                $region88: #{tpu_custom_call.1} parent=74 // loop_footer_branch
                  %622 = sbr.rel target = $region84
                $region89: #{tpu_custom_call.1} parent=74 // loop_exit
                  _
                %s651 = sshrl.u32 %s520, 1
                %s652 = sand.u32 %s520, 1
                %s653 = smul.u32 %s651, 2
                %s654 = smul.u32 8, %s653
                %s655 = scalar_lea.vmem %s250, %s654
                %s656 = smul.u32 8, %s653
                %s657 = scalar_lea.vmem %s233, %s656 [#allocation2]
                %s658 = smul.u32 %s240, %s652
                // While loop
                $region90: #{tpu_custom_call.1} parent=74 // loop_pre_header
                  _
                $region91: #{tpu_custom_call.1} parent=74 // loop_header
                  %s660 = sphi 0, %s662
                  %p661 = scmp.ge.s32.totalorder %s660, %s658
                  %s665 = sphi 0, %s677
                  %s666 = sphi 0, %s673
                  %s667 = sphi %s655, %s684
                  %s668 = sphi %s657, %s685
                $region92: #{tpu_custom_call.1} parent=74 // loop_header_branch
                  %664 = sbr.rel (%p661) target = $region96
                $region93: #{tpu_custom_call.1} parent=74 // loop_body
                  %v669 = vld [vmem:[%s667] sm:$0xff]
                  %670 = vst [vmem:[%s668] sm:$0xff] %v669
                  %s671 = sadd.s32 1, %s666
                  %p672 = scmp.ge.s32.totalorder %s671, %s652
                  %s673 = scalar_select %p672, 0, %s671
                  %s674 = sadd.s32 1, %s665
                  %s675 = scalar_select %p672, %s674, %s665
                  %p676 = scmp.ge.s32.totalorder %s675, %s240
                  %s677 = scalar_select %p676, 0, %s675
                  %s678 = smul.u32 %s677, 40
                  %s679 = smul.u32 %s673, 8
                  %s680 = sadd.s32 %s678, %s679
                  %s681 = smul.u32 %s677, 32
                  %s682 = smul.u32 %s673, 8
                  %s683 = sadd.s32 %s681, %s682
                  %s684 = scalar_lea.vmem %s655, %s680
                  %s685 = scalar_lea.vmem %s657, %s683 [#allocation2]
                $region94: #{tpu_custom_call.1} parent=74 // loop_footer
                  %s662 = sadd.s32 %s660, 1
                $region95: #{tpu_custom_call.1} parent=74 // loop_footer_branch
                  %659 = sbr.rel target = $region91
                $region96: #{tpu_custom_call.1} parent=74 // loop_exit
                  _
                %s686 = sshll.u32 1, %s515
                %s687 = ssub.s32 %s686, 1
                %s688 = sdiv.u32.pop %s240, 17
                %s689 = srem.u32.pop %s240, 17
                // While loop
                $region97: #{tpu_custom_call.1} parent=74 // loop_pre_header
                  _
                $region98: #{tpu_custom_call.1} parent=74 // loop_header
                  %s691 = sphi 0, %s693
                  %p692 = scmp.ge.s32.totalorder %s691, %s688
                  %s696 = sphi 0, %s735
                  %s697 = sphi %s517, %s738
                  %s698 = sphi %s519, %s739
                $region99: #{tpu_custom_call.1} parent=74 // loop_header_branch
                  %695 = sbr.rel (%p692) target = $region103
                $region100: #{tpu_custom_call.1} parent=74 // loop_body
                  %v699 = vld [vmem:[%s697] sm:%s687]
                  %700 = vst [vmem:[%s698] sm:%s687] %v699
                  %v701 = vld [vmem:[%s697 + $0x28] sm:%s687]
                  %702 = vst [vmem:[%s698 + $0x20] sm:%s687] %v701
                  %v703 = vld [vmem:[%s697 + $0x50] sm:%s687]
                  %704 = vst [vmem:[%s698 + $0x40] sm:%s687] %v703
                  %v705 = vld [vmem:[%s697 + $0x78] sm:%s687]
                  %706 = vst [vmem:[%s698 + $0x60] sm:%s687] %v705
                  %v707 = vld [vmem:[%s697 + $0xa0] sm:%s687]
                  %708 = vst [vmem:[%s698 + $0x80] sm:%s687] %v707
                  %v709 = vld [vmem:[%s697 + $0xc8] sm:%s687]
                  %710 = vst [vmem:[%s698 + $0xa0] sm:%s687] %v709
                  %v711 = vld [vmem:[%s697 + $0xf0] sm:%s687]
                  %712 = vst [vmem:[%s698 + $0xc0] sm:%s687] %v711
                  %v713 = vld [vmem:[%s697 + $0x118] sm:%s687]
                  %714 = vst [vmem:[%s698 + $0xe0] sm:%s687] %v713
                  %v715 = vld [vmem:[%s697 + $0x140] sm:%s687]
                  %716 = vst [vmem:[%s698 + $0x100] sm:%s687] %v715
                  %v717 = vld [vmem:[%s697 + $0x168] sm:%s687]
                  %718 = vst [vmem:[%s698 + $0x120] sm:%s687] %v717
                  %v719 = vld [vmem:[%s697 + $0x190] sm:%s687]
                  %720 = vst [vmem:[%s698 + $0x140] sm:%s687] %v719
                  %v721 = vld [vmem:[%s697 + $0x1b8] sm:%s687]
                  %722 = vst [vmem:[%s698 + $0x160] sm:%s687] %v721
                  %v723 = vld [vmem:[%s697 + $0x1e0] sm:%s687]
                  %724 = vst [vmem:[%s698 + $0x180] sm:%s687] %v723
                  %v725 = vld [vmem:[%s697 + $0x208] sm:%s687]
                  %726 = vst [vmem:[%s698 + $0x1a0] sm:%s687] %v725
                  %v727 = vld [vmem:[%s697 + $0x230] sm:%s687]
                  %728 = vst [vmem:[%s698 + $0x1c0] sm:%s687] %v727
                  %v729 = vld [vmem:[%s697 + $0x258] sm:%s687]
                  %730 = vst [vmem:[%s698 + $0x1e0] sm:%s687] %v729
                  %v731 = vld [vmem:[%s697 + $0x280] sm:%s687]
                  %732 = vst [vmem:[%s698 + $0x200] sm:%s687] %v731
                  %s733 = sadd.s32 1, %s696
                  %p734 = scmp.ge.s32.totalorder %s733, %s688
                  %s735 = scalar_select %p734, 0, %s733
                  %s736 = smul.u32 %s735, 680
                  %s737 = smul.u32 %s735, 544
                  %s738 = scalar_lea.vmem %s517, %s736
                  %s739 = scalar_lea.vmem %s519, %s737 [#allocation2]
                $region101: #{tpu_custom_call.1} parent=74 // loop_footer
                  %s693 = sadd.s32 %s691, 1
                $region102: #{tpu_custom_call.1} parent=74 // loop_footer_branch
                  %690 = sbr.rel target = $region98
                $region103: #{tpu_custom_call.1} parent=74 // loop_exit
                  _
                %s740 = sdiv.u32.pop %s240, 17
                %s741 = srem.u32.pop %s240, 17
                %s742 = smul.u32 %s740, 17
                %s743 = smul.u32 40, %s742
                %s744 = scalar_lea.vmem %s517, %s743
                %s745 = smul.u32 32, %s742
                %s746 = scalar_lea.vmem %s519, %s745 [#allocation2]
                // While loop
                $region104: #{tpu_custom_call.1} parent=74 // loop_pre_header
                  _
                $region105: #{tpu_custom_call.1} parent=74 // loop_header
                  %s748 = sphi 0, %s750
                  %p749 = scmp.ge.s32.totalorder %s748, %s741
                  %s753 = sphi 0, %s760
                  %s754 = sphi %s744, %s763
                  %s755 = sphi %s746, %s764
                $region106: #{tpu_custom_call.1} parent=74 // loop_header_branch
                  %752 = sbr.rel (%p749) target = $region110
                $region107: #{tpu_custom_call.1} parent=74 // loop_body
                  %v756 = vld [vmem:[%s754] sm:%s687]
                  %757 = vst [vmem:[%s755] sm:%s687] %v756
                  %s758 = sadd.s32 1, %s753
                  %p759 = scmp.ge.s32.totalorder %s758, %s741
                  %s760 = scalar_select %p759, 0, %s758
                  %s761 = smul.u32 %s760, 40
                  %s762 = smul.u32 %s760, 32
                  %s763 = scalar_lea.vmem %s744, %s761
                  %s764 = scalar_lea.vmem %s746, %s762 [#allocation2]
                $region108: #{tpu_custom_call.1} parent=74 // loop_footer
                  %s750 = sadd.s32 %s748, 1
                $region109: #{tpu_custom_call.1} parent=74 // loop_footer_branch
                  %747 = sbr.rel target = $region105
                $region110: #{tpu_custom_call.1} parent=74 // loop_exit
                  _
              $region75: #{tpu_custom_call.1} parent=27 // pred_fallthru
                _
            $region28: #{tpu_custom_call.1} parent=23 // pred_fallthru
              _
            // Predicated region
            $region29: #{tpu_custom_call.1} parent=23 // pred_check
              %p259 = pneg %p255
            $region30: #{tpu_custom_call.1} parent=23 // pred_check_branch
              %261 = sbr.rel (%p259) target = $region32
            $region31: #{tpu_custom_call.1} parent=23 // pred_region
              %s262 = sshll.u32 1, %s251
              %s263 = ssub.s32 %s262, 1
              %s264 = sdiv.u32.pop %s240, 17
              %s265 = srem.u32.pop %s240, 17
              // While loop
              $region33: #{tpu_custom_call.1} parent=31 // loop_pre_header
                _
              $region34: #{tpu_custom_call.1} parent=31 // loop_header
                %s267 = sphi 0, %s269
                %p268 = scmp.ge.s32.totalorder %s267, %s264
                %s272 = sphi 0, %s311
                %s273 = sphi %s250, %s314
                %s274 = sphi %s233, %s315
              $region35: #{tpu_custom_call.1} parent=31 // loop_header_branch
                %271 = sbr.rel (%p268) target = $region39
              $region36: #{tpu_custom_call.1} parent=31 // loop_body
                %v275 = vld [vmem:[%s273] sm:%s263]
                %276 = vst [vmem:[%s274] sm:%s263] %v275
                %v277 = vld [vmem:[%s273 + $0x28] sm:%s263]
                %278 = vst [vmem:[%s274 + $0x20] sm:%s263] %v277
                %v279 = vld [vmem:[%s273 + $0x50] sm:%s263]
                %280 = vst [vmem:[%s274 + $0x40] sm:%s263] %v279
                %v281 = vld [vmem:[%s273 + $0x78] sm:%s263]
                %282 = vst [vmem:[%s274 + $0x60] sm:%s263] %v281
                %v283 = vld [vmem:[%s273 + $0xa0] sm:%s263]
                %284 = vst [vmem:[%s274 + $0x80] sm:%s263] %v283
                %v285 = vld [vmem:[%s273 + $0xc8] sm:%s263]
                %286 = vst [vmem:[%s274 + $0xa0] sm:%s263] %v285
                %v287 = vld [vmem:[%s273 + $0xf0] sm:%s263]
                %288 = vst [vmem:[%s274 + $0xc0] sm:%s263] %v287
                %v289 = vld [vmem:[%s273 + $0x118] sm:%s263]
                %290 = vst [vmem:[%s274 + $0xe0] sm:%s263] %v289
                %v291 = vld [vmem:[%s273 + $0x140] sm:%s263]
                %292 = vst [vmem:[%s274 + $0x100] sm:%s263] %v291
                %v293 = vld [vmem:[%s273 + $0x168] sm:%s263]
                %294 = vst [vmem:[%s274 + $0x120] sm:%s263] %v293
                %v295 = vld [vmem:[%s273 + $0x190] sm:%s263]
                %296 = vst [vmem:[%s274 + $0x140] sm:%s263] %v295
                %v297 = vld [vmem:[%s273 + $0x1b8] sm:%s263]
                %298 = vst [vmem:[%s274 + $0x160] sm:%s263] %v297
                %v299 = vld [vmem:[%s273 + $0x1e0] sm:%s263]
                %300 = vst [vmem:[%s274 + $0x180] sm:%s263] %v299
                %v301 = vld [vmem:[%s273 + $0x208] sm:%s263]
                %302 = vst [vmem:[%s274 + $0x1a0] sm:%s263] %v301
                %v303 = vld [vmem:[%s273 + $0x230] sm:%s263]
                %304 = vst [vmem:[%s274 + $0x1c0] sm:%s263] %v303
                %v305 = vld [vmem:[%s273 + $0x258] sm:%s263]
                %306 = vst [vmem:[%s274 + $0x1e0] sm:%s263] %v305
                %v307 = vld [vmem:[%s273 + $0x280] sm:%s263]
                %308 = vst [vmem:[%s274 + $0x200] sm:%s263] %v307
                %s309 = sadd.s32 1, %s272
                %p310 = scmp.ge.s32.totalorder %s309, %s264
                %s311 = scalar_select %p310, 0, %s309
                %s312 = smul.u32 %s311, 680
                %s313 = smul.u32 %s311, 544
                %s314 = scalar_lea.vmem %s250, %s312
                %s315 = scalar_lea.vmem %s233, %s313 [#allocation2]
              $region37: #{tpu_custom_call.1} parent=31 // loop_footer
                %s269 = sadd.s32 %s267, 1
              $region38: #{tpu_custom_call.1} parent=31 // loop_footer_branch
                %266 = sbr.rel target = $region34
              $region39: #{tpu_custom_call.1} parent=31 // loop_exit
                _
              %s316 = sdiv.u32.pop %s240, 17
              %s317 = srem.u32.pop %s240, 17
              %s318 = smul.u32 %s316, 17
              %s319 = smul.u32 40, %s318
              %s320 = scalar_lea.vmem %s250, %s319
              %s321 = smul.u32 32, %s318
              %s322 = scalar_lea.vmem %s233, %s321 [#allocation2]
              // While loop
              $region40: #{tpu_custom_call.1} parent=31 // loop_pre_header
                _
              $region41: #{tpu_custom_call.1} parent=31 // loop_header
                %s324 = sphi 0, %s326
                %p325 = scmp.ge.s32.totalorder %s324, %s317
                %s329 = sphi 0, %s336
                %s330 = sphi %s320, %s339
                %s331 = sphi %s322, %s340
              $region42: #{tpu_custom_call.1} parent=31 // loop_header_branch
                %328 = sbr.rel (%p325) target = $region46
              $region43: #{tpu_custom_call.1} parent=31 // loop_body
                %v332 = vld [vmem:[%s330] sm:%s263]
                %333 = vst [vmem:[%s331] sm:%s263] %v332
                %s334 = sadd.s32 1, %s329
                %p335 = scmp.ge.s32.totalorder %s334, %s317
                %s336 = scalar_select %p335, 0, %s334
                %s337 = smul.u32 %s336, 40
                %s338 = smul.u32 %s336, 32
                %s339 = scalar_lea.vmem %s320, %s337
                %s340 = scalar_lea.vmem %s322, %s338 [#allocation2]
              $region44: #{tpu_custom_call.1} parent=31 // loop_footer
                %s326 = sadd.s32 %s324, 1
              $region45: #{tpu_custom_call.1} parent=31 // loop_footer_branch
                %323 = sbr.rel target = $region41
              $region46: #{tpu_custom_call.1} parent=31 // loop_exit
                _
            $region32: #{tpu_custom_call.1} parent=23 // pred_fallthru
              _
          $region24: #{tpu_custom_call.1} parent=19 // pred_fallthru
            _
          %765 = vnop
        $region20: #{tpu_custom_call.1} parent=15 // pred_fallthru
          _
        // Predicated region
        $region111: #{tpu_custom_call.1} parent=15 // pred_check
          %p766 = pneg %p98
        $region112: #{tpu_custom_call.1} parent=15 // pred_check_branch
          %768 = sbr.rel (%p766) target = $region114
        $region113: #{tpu_custom_call.1} parent=15 // pred_region
          %s769 = sand.u32 %s88, 1
          %s770 = sand.u32 %s88, 1
          %s771 = smul.addr %s770, 544
          %s772 = scalar_lea.vmem [#allocation3], %s771
          %s773 = smul.u32 %s28, 2
          %s774 = sadd.s32 %s773, %s29
          %s775 = smul.u32 17, %s774
          %s776 = smul.u32 4, %s30
          %s777 = ssub.s32 67, %s775
          %p778 = scmp.lt.s32.totalorder %s777, 17
          %s779 = scalar_select %p778, %s777, 17
          %s780 = smul.u32 8, %s779
          %s781 = ssub.s32 5, %s776
          %p782 = scmp.lt.s32.totalorder %s781, 4
          %s783 = scalar_select %p782, %s781, 4
          %s784 = smul.u32 %s780, %s783
          %p785 = scmp.ne.s32.totalorder 0, %s784
          %s786 = smul.addr %s775, 5
          %s787 = sadd.s32 %s776, %s786
          %s788 = smul.addr %s787, 8
          %s789 = scalar_lea.vmem %s1, %s788
          %s790 = smul.u32 %s783, 8
          // Predicated region
          $region115: #{tpu_custom_call.1} parent=113 // pred_check
            %p791 = pneg %p785
          $region116: #{tpu_custom_call.1} parent=113 // pred_check_branch
            %793 = sbr.rel (%p791) target = $region118
          $region117: #{tpu_custom_call.1} parent=113 // pred_region
            %p794 = scmp.lt.u32.totalorder %s790, 8
            %p795 = pneg %p794
            // Predicated region
            $region119: #{tpu_custom_call.1} parent=117 // pred_check
              _
            $region120: #{tpu_custom_call.1} parent=117 // pred_check_branch
              %797 = sbr.rel (%p794) target = $region122
            $region121: #{tpu_custom_call.1} parent=117 // pred_region
              %s880 = sand.u32 %s790, 7
              %p881 = scmp.eq.s32.totalorder %s880, 0
              // Predicated region
              $region141: #{tpu_custom_call.1} parent=121 // pred_check
                %p882 = pneg %p881
              $region142: #{tpu_custom_call.1} parent=121 // pred_check_branch
                %884 = sbr.rel (%p882) target = $region144
              $region143: #{tpu_custom_call.1} parent=121 // pred_region
                %s885 = sshrl.u32 %s790, 3
                %s886 = sshrl.u32 %s779, 4
                %s887 = sshrl.u32 %s885, 1
                %s888 = smul.u32 %s886, %s887
                // While loop
                $region145: #{tpu_custom_call.1} parent=143 // loop_pre_header
                  _
                $region146: #{tpu_custom_call.1} parent=143 // loop_header
                  %s890 = sphi 0, %s892
                  %p891 = scmp.ge.s32.totalorder %s890, %s888
                  %s895 = sphi 0, %s969
                  %s896 = sphi 0, %s965
                  %s897 = sphi %s789, %s976
                  %s898 = sphi %s772, %s977
                $region147: #{tpu_custom_call.1} parent=143 // loop_header_branch
                  %894 = sbr.rel (%p891) target = $region151
                $region148: #{tpu_custom_call.1} parent=143 // loop_body
                  %v899 = vld [vmem:[%s897] sm:$0xff]
                  %900 = vst [vmem:[%s898] sm:$0xff] %v899
                  %v901 = vld [vmem:[%s897 + $0x8] sm:$0xff]
                  %902 = vst [vmem:[%s898 + $0x8] sm:$0xff] %v901
                  %v903 = vld [vmem:[%s897 + $0x28] sm:$0xff]
                  %904 = vst [vmem:[%s898 + $0x20] sm:$0xff] %v903
                  %v905 = vld [vmem:[%s897 + $0x30] sm:$0xff]
                  %906 = vst [vmem:[%s898 + $0x28] sm:$0xff] %v905
                  %v907 = vld [vmem:[%s897 + $0x50] sm:$0xff]
                  %908 = vst [vmem:[%s898 + $0x40] sm:$0xff] %v907
                  %v909 = vld [vmem:[%s897 + $0x58] sm:$0xff]
                  %910 = vst [vmem:[%s898 + $0x48] sm:$0xff] %v909
                  %v911 = vld [vmem:[%s897 + $0x78] sm:$0xff]
                  %912 = vst [vmem:[%s898 + $0x60] sm:$0xff] %v911
                  %v913 = vld [vmem:[%s897 + $0x80] sm:$0xff]
                  %914 = vst [vmem:[%s898 + $0x68] sm:$0xff] %v913
                  %v915 = vld [vmem:[%s897 + $0xa0] sm:$0xff]
                  %916 = vst [vmem:[%s898 + $0x80] sm:$0xff] %v915
                  %v917 = vld [vmem:[%s897 + $0xa8] sm:$0xff]
                  %918 = vst [vmem:[%s898 + $0x88] sm:$0xff] %v917
                  %v919 = vld [vmem:[%s897 + $0xc8] sm:$0xff]
                  %920 = vst [vmem:[%s898 + $0xa0] sm:$0xff] %v919
                  %v921 = vld [vmem:[%s897 + $0xd0] sm:$0xff]
                  %922 = vst [vmem:[%s898 + $0xa8] sm:$0xff] %v921
                  %v923 = vld [vmem:[%s897 + $0xf0] sm:$0xff]
                  %924 = vst [vmem:[%s898 + $0xc0] sm:$0xff] %v923
                  %v925 = vld [vmem:[%s897 + $0xf8] sm:$0xff]
                  %926 = vst [vmem:[%s898 + $0xc8] sm:$0xff] %v925
                  %v927 = vld [vmem:[%s897 + $0x118] sm:$0xff]
                  %928 = vst [vmem:[%s898 + $0xe0] sm:$0xff] %v927
                  %v929 = vld [vmem:[%s897 + $0x120] sm:$0xff]
                  %930 = vst [vmem:[%s898 + $0xe8] sm:$0xff] %v929
                  %v931 = vld [vmem:[%s897 + $0x140] sm:$0xff]
                  %932 = vst [vmem:[%s898 + $0x100] sm:$0xff] %v931
                  %v933 = vld [vmem:[%s897 + $0x148] sm:$0xff]
                  %934 = vst [vmem:[%s898 + $0x108] sm:$0xff] %v933
                  %v935 = vld [vmem:[%s897 + $0x168] sm:$0xff]
                  %936 = vst [vmem:[%s898 + $0x120] sm:$0xff] %v935
                  %v937 = vld [vmem:[%s897 + $0x170] sm:$0xff]
                  %938 = vst [vmem:[%s898 + $0x128] sm:$0xff] %v937
                  %v939 = vld [vmem:[%s897 + $0x190] sm:$0xff]
                  %940 = vst [vmem:[%s898 + $0x140] sm:$0xff] %v939
                  %v941 = vld [vmem:[%s897 + $0x198] sm:$0xff]
                  %942 = vst [vmem:[%s898 + $0x148] sm:$0xff] %v941
                  %v943 = vld [vmem:[%s897 + $0x1b8] sm:$0xff]
                  %944 = vst [vmem:[%s898 + $0x160] sm:$0xff] %v943
                  %v945 = vld [vmem:[%s897 + $0x1c0] sm:$0xff]
                  %946 = vst [vmem:[%s898 + $0x168] sm:$0xff] %v945
                  %v947 = vld [vmem:[%s897 + $0x1e0] sm:$0xff]
                  %948 = vst [vmem:[%s898 + $0x180] sm:$0xff] %v947
                  %v949 = vld [vmem:[%s897 + $0x1e8] sm:$0xff]
                  %950 = vst [vmem:[%s898 + $0x188] sm:$0xff] %v949
                  %v951 = vld [vmem:[%s897 + $0x208] sm:$0xff]
                  %952 = vst [vmem:[%s898 + $0x1a0] sm:$0xff] %v951
                  %v953 = vld [vmem:[%s897 + $0x210] sm:$0xff]
                  %954 = vst [vmem:[%s898 + $0x1a8] sm:$0xff] %v953
                  %v955 = vld [vmem:[%s897 + $0x230] sm:$0xff]
                  %956 = vst [vmem:[%s898 + $0x1c0] sm:$0xff] %v955
                  %v957 = vld [vmem:[%s897 + $0x238] sm:$0xff]
                  %958 = vst [vmem:[%s898 + $0x1c8] sm:$0xff] %v957
                  %v959 = vld [vmem:[%s897 + $0x258] sm:$0xff]
                  %960 = vst [vmem:[%s898 + $0x1e0] sm:$0xff] %v959
                  %v961 = vld [vmem:[%s897 + $0x260] sm:$0xff]
                  %962 = vst [vmem:[%s898 + $0x1e8] sm:$0xff] %v961
                  %s963 = sadd.s32 1, %s896
                  %p964 = scmp.ge.s32.totalorder %s963, %s887
                  %s965 = scalar_select %p964, 0, %s963
                  %s966 = sadd.s32 1, %s895
                  %s967 = scalar_select %p964, %s966, %s895
                  %p968 = scmp.ge.s32.totalorder %s967, %s886
                  %s969 = scalar_select %p968, 0, %s967
                  %s970 = smul.u32 %s969, 640
                  %s971 = smul.u32 %s965, 16
                  %s972 = sadd.s32 %s970, %s971
                  %s973 = smul.u32 %s969, 512
                  %s974 = smul.u32 %s965, 16
                  %s975 = sadd.s32 %s973, %s974
                  %s976 = scalar_lea.vmem %s789, %s972
                  %s977 = scalar_lea.vmem %s772, %s975 [#allocation3]
                $region149: #{tpu_custom_call.1} parent=143 // loop_footer
                  %s892 = sadd.s32 %s890, 1
                $region150: #{tpu_custom_call.1} parent=143 // loop_footer_branch
                  %889 = sbr.rel target = $region146
                $region151: #{tpu_custom_call.1} parent=143 // loop_exit
                  _
                %s978 = sshrl.u32 %s885, 1
                %s979 = sshrl.u32 %s779, 4
                %s980 = sand.u32 %s779, 15
                %s981 = smul.u32 %s979, 16
                %s982 = smul.u32 40, %s981
                %s983 = scalar_lea.vmem %s789, %s982
                %s984 = smul.u32 32, %s981
                %s985 = scalar_lea.vmem %s772, %s984 [#allocation3]
                %s986 = smul.u32 %s980, %s978
                // While loop
                $region152: #{tpu_custom_call.1} parent=143 // loop_pre_header
                  _
                $region153: #{tpu_custom_call.1} parent=143 // loop_header
                  %s988 = sphi 0, %s990
                  %p989 = scmp.ge.s32.totalorder %s988, %s986
                  %s993 = sphi 0, %s1007
                  %s994 = sphi 0, %s1003
                  %s995 = sphi %s983, %s1014
                  %s996 = sphi %s985, %s1015
                $region154: #{tpu_custom_call.1} parent=143 // loop_header_branch
                  %992 = sbr.rel (%p989) target = $region158
                $region155: #{tpu_custom_call.1} parent=143 // loop_body
                  %v997 = vld [vmem:[%s995] sm:$0xff]
                  %998 = vst [vmem:[%s996] sm:$0xff] %v997
                  %v999 = vld [vmem:[%s995 + $0x8] sm:$0xff]
                  %1000 = vst [vmem:[%s996 + $0x8] sm:$0xff] %v999
                  %s1001 = sadd.s32 1, %s994
                  %p1002 = scmp.ge.s32.totalorder %s1001, %s978
                  %s1003 = scalar_select %p1002, 0, %s1001
                  %s1004 = sadd.s32 1, %s993
                  %s1005 = scalar_select %p1002, %s1004, %s993
                  %p1006 = scmp.ge.s32.totalorder %s1005, %s980
                  %s1007 = scalar_select %p1006, 0, %s1005
                  %s1008 = smul.u32 %s1007, 40
                  %s1009 = smul.u32 %s1003, 16
                  %s1010 = sadd.s32 %s1008, %s1009
                  %s1011 = smul.u32 %s1007, 32
                  %s1012 = smul.u32 %s1003, 16
                  %s1013 = sadd.s32 %s1011, %s1012
                  %s1014 = scalar_lea.vmem %s983, %s1010
                  %s1015 = scalar_lea.vmem %s985, %s1013 [#allocation3]
                $region156: #{tpu_custom_call.1} parent=143 // loop_footer
                  %s990 = sadd.s32 %s988, 1
                $region157: #{tpu_custom_call.1} parent=143 // loop_footer_branch
                  %987 = sbr.rel target = $region153
                $region158: #{tpu_custom_call.1} parent=143 // loop_exit
                  _
                %s1016 = sshrl.u32 %s885, 1
                %s1017 = sand.u32 %s885, 1
                %s1018 = smul.u32 %s1016, 2
                %s1019 = smul.u32 8, %s1018
                %s1020 = scalar_lea.vmem %s789, %s1019
                %s1021 = smul.u32 8, %s1018
                %s1022 = scalar_lea.vmem %s772, %s1021 [#allocation3]
                %s1023 = smul.u32 %s779, %s1017
                // While loop
                $region159: #{tpu_custom_call.1} parent=143 // loop_pre_header
                  _
                $region160: #{tpu_custom_call.1} parent=143 // loop_header
                  %s1025 = sphi 0, %s1027
                  %p1026 = scmp.ge.s32.totalorder %s1025, %s1023
                  %s1030 = sphi 0, %s1042
                  %s1031 = sphi 0, %s1038
                  %s1032 = sphi %s1020, %s1049
                  %s1033 = sphi %s1022, %s1050
                $region161: #{tpu_custom_call.1} parent=143 // loop_header_branch
                  %1029 = sbr.rel (%p1026) target = $region165
                $region162: #{tpu_custom_call.1} parent=143 // loop_body
                  %v1034 = vld [vmem:[%s1032] sm:$0xff]
                  %1035 = vst [vmem:[%s1033] sm:$0xff] %v1034
                  %s1036 = sadd.s32 1, %s1031
                  %p1037 = scmp.ge.s32.totalorder %s1036, %s1017
                  %s1038 = scalar_select %p1037, 0, %s1036
                  %s1039 = sadd.s32 1, %s1030
                  %s1040 = scalar_select %p1037, %s1039, %s1030
                  %p1041 = scmp.ge.s32.totalorder %s1040, %s779
                  %s1042 = scalar_select %p1041, 0, %s1040
                  %s1043 = smul.u32 %s1042, 40
                  %s1044 = smul.u32 %s1038, 8
                  %s1045 = sadd.s32 %s1043, %s1044
                  %s1046 = smul.u32 %s1042, 32
                  %s1047 = smul.u32 %s1038, 8
                  %s1048 = sadd.s32 %s1046, %s1047
                  %s1049 = scalar_lea.vmem %s1020, %s1045
                  %s1050 = scalar_lea.vmem %s1022, %s1048 [#allocation3]
                $region163: #{tpu_custom_call.1} parent=143 // loop_footer
                  %s1027 = sadd.s32 %s1025, 1
                $region164: #{tpu_custom_call.1} parent=143 // loop_footer_branch
                  %1024 = sbr.rel target = $region160
                $region165: #{tpu_custom_call.1} parent=143 // loop_exit
                  _
              $region144: #{tpu_custom_call.1} parent=121 // pred_fallthru
                _
              %p1051 = pneg %p881
              // Predicated region
              $region166: #{tpu_custom_call.1} parent=121 // pred_check
                _
              $region167: #{tpu_custom_call.1} parent=121 // pred_check_branch
                %1053 = sbr.rel (%p881) target = $region169
              $region168: #{tpu_custom_call.1} parent=121 // pred_region
                %s1054 = sand.u32 %s790, 7
                %s1055 = ssub.s32 %s790, %s1054
                %s1056 = scalar_lea.vmem %s789, %s1055
                %s1057 = ssub.s32 %s790, %s1054
                %s1058 = scalar_lea.vmem %s772, %s1057 [#allocation3]
                %s1059 = sshrl.u32 %s790, 3
                %s1060 = sshrl.u32 %s779, 4
                %s1061 = sshrl.u32 %s1059, 1
                %s1062 = smul.u32 %s1060, %s1061
                // While loop
                $region170: #{tpu_custom_call.1} parent=168 // loop_pre_header
                  _
                $region171: #{tpu_custom_call.1} parent=168 // loop_header
                  %s1064 = sphi 0, %s1066
                  %p1065 = scmp.ge.s32.totalorder %s1064, %s1062
                  %s1069 = sphi 0, %s1143
                  %s1070 = sphi 0, %s1139
                  %s1071 = sphi %s789, %s1150
                  %s1072 = sphi %s772, %s1151
                $region172: #{tpu_custom_call.1} parent=168 // loop_header_branch
                  %1068 = sbr.rel (%p1065) target = $region176
                $region173: #{tpu_custom_call.1} parent=168 // loop_body
                  %v1073 = vld [vmem:[%s1071] sm:$0xff]
                  %1074 = vst [vmem:[%s1072] sm:$0xff] %v1073
                  %v1075 = vld [vmem:[%s1071 + $0x8] sm:$0xff]
                  %1076 = vst [vmem:[%s1072 + $0x8] sm:$0xff] %v1075
                  %v1077 = vld [vmem:[%s1071 + $0x28] sm:$0xff]
                  %1078 = vst [vmem:[%s1072 + $0x20] sm:$0xff] %v1077
                  %v1079 = vld [vmem:[%s1071 + $0x30] sm:$0xff]
                  %1080 = vst [vmem:[%s1072 + $0x28] sm:$0xff] %v1079
                  %v1081 = vld [vmem:[%s1071 + $0x50] sm:$0xff]
                  %1082 = vst [vmem:[%s1072 + $0x40] sm:$0xff] %v1081
                  %v1083 = vld [vmem:[%s1071 + $0x58] sm:$0xff]
                  %1084 = vst [vmem:[%s1072 + $0x48] sm:$0xff] %v1083
                  %v1085 = vld [vmem:[%s1071 + $0x78] sm:$0xff]
                  %1086 = vst [vmem:[%s1072 + $0x60] sm:$0xff] %v1085
                  %v1087 = vld [vmem:[%s1071 + $0x80] sm:$0xff]
                  %1088 = vst [vmem:[%s1072 + $0x68] sm:$0xff] %v1087
                  %v1089 = vld [vmem:[%s1071 + $0xa0] sm:$0xff]
                  %1090 = vst [vmem:[%s1072 + $0x80] sm:$0xff] %v1089
                  %v1091 = vld [vmem:[%s1071 + $0xa8] sm:$0xff]
                  %1092 = vst [vmem:[%s1072 + $0x88] sm:$0xff] %v1091
                  %v1093 = vld [vmem:[%s1071 + $0xc8] sm:$0xff]
                  %1094 = vst [vmem:[%s1072 + $0xa0] sm:$0xff] %v1093
                  %v1095 = vld [vmem:[%s1071 + $0xd0] sm:$0xff]
                  %1096 = vst [vmem:[%s1072 + $0xa8] sm:$0xff] %v1095
                  %v1097 = vld [vmem:[%s1071 + $0xf0] sm:$0xff]
                  %1098 = vst [vmem:[%s1072 + $0xc0] sm:$0xff] %v1097
                  %v1099 = vld [vmem:[%s1071 + $0xf8] sm:$0xff]
                  %1100 = vst [vmem:[%s1072 + $0xc8] sm:$0xff] %v1099
                  %v1101 = vld [vmem:[%s1071 + $0x118] sm:$0xff]
                  %1102 = vst [vmem:[%s1072 + $0xe0] sm:$0xff] %v1101
                  %v1103 = vld [vmem:[%s1071 + $0x120] sm:$0xff]
                  %1104 = vst [vmem:[%s1072 + $0xe8] sm:$0xff] %v1103
                  %v1105 = vld [vmem:[%s1071 + $0x140] sm:$0xff]
                  %1106 = vst [vmem:[%s1072 + $0x100] sm:$0xff] %v1105
                  %v1107 = vld [vmem:[%s1071 + $0x148] sm:$0xff]
                  %1108 = vst [vmem:[%s1072 + $0x108] sm:$0xff] %v1107
                  %v1109 = vld [vmem:[%s1071 + $0x168] sm:$0xff]
                  %1110 = vst [vmem:[%s1072 + $0x120] sm:$0xff] %v1109
                  %v1111 = vld [vmem:[%s1071 + $0x170] sm:$0xff]
                  %1112 = vst [vmem:[%s1072 + $0x128] sm:$0xff] %v1111
                  %v1113 = vld [vmem:[%s1071 + $0x190] sm:$0xff]
                  %1114 = vst [vmem:[%s1072 + $0x140] sm:$0xff] %v1113
                  %v1115 = vld [vmem:[%s1071 + $0x198] sm:$0xff]
                  %1116 = vst [vmem:[%s1072 + $0x148] sm:$0xff] %v1115
                  %v1117 = vld [vmem:[%s1071 + $0x1b8] sm:$0xff]
                  %1118 = vst [vmem:[%s1072 + $0x160] sm:$0xff] %v1117
                  %v1119 = vld [vmem:[%s1071 + $0x1c0] sm:$0xff]
                  %1120 = vst [vmem:[%s1072 + $0x168] sm:$0xff] %v1119
                  %v1121 = vld [vmem:[%s1071 + $0x1e0] sm:$0xff]
                  %1122 = vst [vmem:[%s1072 + $0x180] sm:$0xff] %v1121
                  %v1123 = vld [vmem:[%s1071 + $0x1e8] sm:$0xff]
                  %1124 = vst [vmem:[%s1072 + $0x188] sm:$0xff] %v1123
                  %v1125 = vld [vmem:[%s1071 + $0x208] sm:$0xff]
                  %1126 = vst [vmem:[%s1072 + $0x1a0] sm:$0xff] %v1125
                  %v1127 = vld [vmem:[%s1071 + $0x210] sm:$0xff]
                  %1128 = vst [vmem:[%s1072 + $0x1a8] sm:$0xff] %v1127
                  %v1129 = vld [vmem:[%s1071 + $0x230] sm:$0xff]
                  %1130 = vst [vmem:[%s1072 + $0x1c0] sm:$0xff] %v1129
                  %v1131 = vld [vmem:[%s1071 + $0x238] sm:$0xff]
                  %1132 = vst [vmem:[%s1072 + $0x1c8] sm:$0xff] %v1131
                  %v1133 = vld [vmem:[%s1071 + $0x258] sm:$0xff]
                  %1134 = vst [vmem:[%s1072 + $0x1e0] sm:$0xff] %v1133
                  %v1135 = vld [vmem:[%s1071 + $0x260] sm:$0xff]
                  %1136 = vst [vmem:[%s1072 + $0x1e8] sm:$0xff] %v1135
                  %s1137 = sadd.s32 1, %s1070
                  %p1138 = scmp.ge.s32.totalorder %s1137, %s1061
                  %s1139 = scalar_select %p1138, 0, %s1137
                  %s1140 = sadd.s32 1, %s1069
                  %s1141 = scalar_select %p1138, %s1140, %s1069
                  %p1142 = scmp.ge.s32.totalorder %s1141, %s1060
                  %s1143 = scalar_select %p1142, 0, %s1141
                  %s1144 = smul.u32 %s1143, 640
                  %s1145 = smul.u32 %s1139, 16
                  %s1146 = sadd.s32 %s1144, %s1145
                  %s1147 = smul.u32 %s1143, 512
                  %s1148 = smul.u32 %s1139, 16
                  %s1149 = sadd.s32 %s1147, %s1148
                  %s1150 = scalar_lea.vmem %s789, %s1146
                  %s1151 = scalar_lea.vmem %s772, %s1149 [#allocation3]
                $region174: #{tpu_custom_call.1} parent=168 // loop_footer
                  %s1066 = sadd.s32 %s1064, 1
                $region175: #{tpu_custom_call.1} parent=168 // loop_footer_branch
                  %1063 = sbr.rel target = $region171
                $region176: #{tpu_custom_call.1} parent=168 // loop_exit
                  _
                %s1152 = sshrl.u32 %s1059, 1
                %s1153 = sshrl.u32 %s779, 4
                %s1154 = sand.u32 %s779, 15
                %s1155 = smul.u32 %s1153, 16
                %s1156 = smul.u32 40, %s1155
                %s1157 = scalar_lea.vmem %s789, %s1156
                %s1158 = smul.u32 32, %s1155
                %s1159 = scalar_lea.vmem %s772, %s1158 [#allocation3]
                %s1160 = smul.u32 %s1154, %s1152
                // While loop
                $region177: #{tpu_custom_call.1} parent=168 // loop_pre_header
                  _
                $region178: #{tpu_custom_call.1} parent=168 // loop_header
                  %s1162 = sphi 0, %s1164
                  %p1163 = scmp.ge.s32.totalorder %s1162, %s1160
                  %s1167 = sphi 0, %s1181
                  %s1168 = sphi 0, %s1177
                  %s1169 = sphi %s1157, %s1188
                  %s1170 = sphi %s1159, %s1189
                $region179: #{tpu_custom_call.1} parent=168 // loop_header_branch
                  %1166 = sbr.rel (%p1163) target = $region183
                $region180: #{tpu_custom_call.1} parent=168 // loop_body
                  %v1171 = vld [vmem:[%s1169] sm:$0xff]
                  %1172 = vst [vmem:[%s1170] sm:$0xff] %v1171
                  %v1173 = vld [vmem:[%s1169 + $0x8] sm:$0xff]
                  %1174 = vst [vmem:[%s1170 + $0x8] sm:$0xff] %v1173
                  %s1175 = sadd.s32 1, %s1168
                  %p1176 = scmp.ge.s32.totalorder %s1175, %s1152
                  %s1177 = scalar_select %p1176, 0, %s1175
                  %s1178 = sadd.s32 1, %s1167
                  %s1179 = scalar_select %p1176, %s1178, %s1167
                  %p1180 = scmp.ge.s32.totalorder %s1179, %s1154
                  %s1181 = scalar_select %p1180, 0, %s1179
                  %s1182 = smul.u32 %s1181, 40
                  %s1183 = smul.u32 %s1177, 16
                  %s1184 = sadd.s32 %s1182, %s1183
                  %s1185 = smul.u32 %s1181, 32
                  %s1186 = smul.u32 %s1177, 16
                  %s1187 = sadd.s32 %s1185, %s1186
                  %s1188 = scalar_lea.vmem %s1157, %s1184
                  %s1189 = scalar_lea.vmem %s1159, %s1187 [#allocation3]
                $region181: #{tpu_custom_call.1} parent=168 // loop_footer
                  %s1164 = sadd.s32 %s1162, 1
                $region182: #{tpu_custom_call.1} parent=168 // loop_footer_branch
                  %1161 = sbr.rel target = $region178
                $region183: #{tpu_custom_call.1} parent=168 // loop_exit
                  _
                %s1190 = sshrl.u32 %s1059, 1
                %s1191 = sand.u32 %s1059, 1
                %s1192 = smul.u32 %s1190, 2
                %s1193 = smul.u32 8, %s1192
                %s1194 = scalar_lea.vmem %s789, %s1193
                %s1195 = smul.u32 8, %s1192
                %s1196 = scalar_lea.vmem %s772, %s1195 [#allocation3]
                %s1197 = smul.u32 %s779, %s1191
                // While loop
                $region184: #{tpu_custom_call.1} parent=168 // loop_pre_header
                  _
                $region185: #{tpu_custom_call.1} parent=168 // loop_header
                  %s1199 = sphi 0, %s1201
                  %p1200 = scmp.ge.s32.totalorder %s1199, %s1197
                  %s1204 = sphi 0, %s1216
                  %s1205 = sphi 0, %s1212
                  %s1206 = sphi %s1194, %s1223
                  %s1207 = sphi %s1196, %s1224
                $region186: #{tpu_custom_call.1} parent=168 // loop_header_branch
                  %1203 = sbr.rel (%p1200) target = $region190
                $region187: #{tpu_custom_call.1} parent=168 // loop_body
                  %v1208 = vld [vmem:[%s1206] sm:$0xff]
                  %1209 = vst [vmem:[%s1207] sm:$0xff] %v1208
                  %s1210 = sadd.s32 1, %s1205
                  %p1211 = scmp.ge.s32.totalorder %s1210, %s1191
                  %s1212 = scalar_select %p1211, 0, %s1210
                  %s1213 = sadd.s32 1, %s1204
                  %s1214 = scalar_select %p1211, %s1213, %s1204
                  %p1215 = scmp.ge.s32.totalorder %s1214, %s779
                  %s1216 = scalar_select %p1215, 0, %s1214
                  %s1217 = smul.u32 %s1216, 40
                  %s1218 = smul.u32 %s1212, 8
                  %s1219 = sadd.s32 %s1217, %s1218
                  %s1220 = smul.u32 %s1216, 32
                  %s1221 = smul.u32 %s1212, 8
                  %s1222 = sadd.s32 %s1220, %s1221
                  %s1223 = scalar_lea.vmem %s1194, %s1219
                  %s1224 = scalar_lea.vmem %s1196, %s1222 [#allocation3]
                $region188: #{tpu_custom_call.1} parent=168 // loop_footer
                  %s1201 = sadd.s32 %s1199, 1
                $region189: #{tpu_custom_call.1} parent=168 // loop_footer_branch
                  %1198 = sbr.rel target = $region185
                $region190: #{tpu_custom_call.1} parent=168 // loop_exit
                  _
                %s1225 = sshll.u32 1, %s1054
                %s1226 = ssub.s32 %s1225, 1
                %s1227 = sdiv.u32.pop %s779, 17
                %s1228 = srem.u32.pop %s779, 17
                // While loop
                $region191: #{tpu_custom_call.1} parent=168 // loop_pre_header
                  _
                $region192: #{tpu_custom_call.1} parent=168 // loop_header
                  %s1230 = sphi 0, %s1232
                  %p1231 = scmp.ge.s32.totalorder %s1230, %s1227
                  %s1235 = sphi 0, %s1274
                  %s1236 = sphi %s1056, %s1277
                  %s1237 = sphi %s1058, %s1278
                $region193: #{tpu_custom_call.1} parent=168 // loop_header_branch
                  %1234 = sbr.rel (%p1231) target = $region197
                $region194: #{tpu_custom_call.1} parent=168 // loop_body
                  %v1238 = vld [vmem:[%s1236] sm:%s1226]
                  %1239 = vst [vmem:[%s1237] sm:%s1226] %v1238
                  %v1240 = vld [vmem:[%s1236 + $0x28] sm:%s1226]
                  %1241 = vst [vmem:[%s1237 + $0x20] sm:%s1226] %v1240
                  %v1242 = vld [vmem:[%s1236 + $0x50] sm:%s1226]
                  %1243 = vst [vmem:[%s1237 + $0x40] sm:%s1226] %v1242
                  %v1244 = vld [vmem:[%s1236 + $0x78] sm:%s1226]
                  %1245 = vst [vmem:[%s1237 + $0x60] sm:%s1226] %v1244
                  %v1246 = vld [vmem:[%s1236 + $0xa0] sm:%s1226]
                  %1247 = vst [vmem:[%s1237 + $0x80] sm:%s1226] %v1246
                  %v1248 = vld [vmem:[%s1236 + $0xc8] sm:%s1226]
                  %1249 = vst [vmem:[%s1237 + $0xa0] sm:%s1226] %v1248
                  %v1250 = vld [vmem:[%s1236 + $0xf0] sm:%s1226]
                  %1251 = vst [vmem:[%s1237 + $0xc0] sm:%s1226] %v1250
                  %v1252 = vld [vmem:[%s1236 + $0x118] sm:%s1226]
                  %1253 = vst [vmem:[%s1237 + $0xe0] sm:%s1226] %v1252
                  %v1254 = vld [vmem:[%s1236 + $0x140] sm:%s1226]
                  %1255 = vst [vmem:[%s1237 + $0x100] sm:%s1226] %v1254
                  %v1256 = vld [vmem:[%s1236 + $0x168] sm:%s1226]
                  %1257 = vst [vmem:[%s1237 + $0x120] sm:%s1226] %v1256
                  %v1258 = vld [vmem:[%s1236 + $0x190] sm:%s1226]
                  %1259 = vst [vmem:[%s1237 + $0x140] sm:%s1226] %v1258
                  %v1260 = vld [vmem:[%s1236 + $0x1b8] sm:%s1226]
                  %1261 = vst [vmem:[%s1237 + $0x160] sm:%s1226] %v1260
                  %v1262 = vld [vmem:[%s1236 + $0x1e0] sm:%s1226]
                  %1263 = vst [vmem:[%s1237 + $0x180] sm:%s1226] %v1262
                  %v1264 = vld [vmem:[%s1236 + $0x208] sm:%s1226]
                  %1265 = vst [vmem:[%s1237 + $0x1a0] sm:%s1226] %v1264
                  %v1266 = vld [vmem:[%s1236 + $0x230] sm:%s1226]
                  %1267 = vst [vmem:[%s1237 + $0x1c0] sm:%s1226] %v1266
                  %v1268 = vld [vmem:[%s1236 + $0x258] sm:%s1226]
                  %1269 = vst [vmem:[%s1237 + $0x1e0] sm:%s1226] %v1268
                  %v1270 = vld [vmem:[%s1236 + $0x280] sm:%s1226]
                  %1271 = vst [vmem:[%s1237 + $0x200] sm:%s1226] %v1270
                  %s1272 = sadd.s32 1, %s1235
                  %p1273 = scmp.ge.s32.totalorder %s1272, %s1227
                  %s1274 = scalar_select %p1273, 0, %s1272
                  %s1275 = smul.u32 %s1274, 680
                  %s1276 = smul.u32 %s1274, 544
                  %s1277 = scalar_lea.vmem %s1056, %s1275
                  %s1278 = scalar_lea.vmem %s1058, %s1276 [#allocation3]
                $region195: #{tpu_custom_call.1} parent=168 // loop_footer
                  %s1232 = sadd.s32 %s1230, 1
                $region196: #{tpu_custom_call.1} parent=168 // loop_footer_branch
                  %1229 = sbr.rel target = $region192
                $region197: #{tpu_custom_call.1} parent=168 // loop_exit
                  _
                %s1279 = sdiv.u32.pop %s779, 17
                %s1280 = srem.u32.pop %s779, 17
                %s1281 = smul.u32 %s1279, 17
                %s1282 = smul.u32 40, %s1281
                %s1283 = scalar_lea.vmem %s1056, %s1282
                %s1284 = smul.u32 32, %s1281
                %s1285 = scalar_lea.vmem %s1058, %s1284 [#allocation3]
                // While loop
                $region198: #{tpu_custom_call.1} parent=168 // loop_pre_header
                  _
                $region199: #{tpu_custom_call.1} parent=168 // loop_header
                  %s1287 = sphi 0, %s1289
                  %p1288 = scmp.ge.s32.totalorder %s1287, %s1280
                  %s1292 = sphi 0, %s1299
                  %s1293 = sphi %s1283, %s1302
                  %s1294 = sphi %s1285, %s1303
                $region200: #{tpu_custom_call.1} parent=168 // loop_header_branch
                  %1291 = sbr.rel (%p1288) target = $region204
                $region201: #{tpu_custom_call.1} parent=168 // loop_body
                  %v1295 = vld [vmem:[%s1293] sm:%s1226]
                  %1296 = vst [vmem:[%s1294] sm:%s1226] %v1295
                  %s1297 = sadd.s32 1, %s1292
                  %p1298 = scmp.ge.s32.totalorder %s1297, %s1280
                  %s1299 = scalar_select %p1298, 0, %s1297
                  %s1300 = smul.u32 %s1299, 40
                  %s1301 = smul.u32 %s1299, 32
                  %s1302 = scalar_lea.vmem %s1283, %s1300
                  %s1303 = scalar_lea.vmem %s1285, %s1301 [#allocation3]
                $region202: #{tpu_custom_call.1} parent=168 // loop_footer
                  %s1289 = sadd.s32 %s1287, 1
                $region203: #{tpu_custom_call.1} parent=168 // loop_footer_branch
                  %1286 = sbr.rel target = $region199
                $region204: #{tpu_custom_call.1} parent=168 // loop_exit
                  _
              $region169: #{tpu_custom_call.1} parent=121 // pred_fallthru
                _
            $region122: #{tpu_custom_call.1} parent=117 // pred_fallthru
              _
            // Predicated region
            $region123: #{tpu_custom_call.1} parent=117 // pred_check
              %p798 = pneg %p794
            $region124: #{tpu_custom_call.1} parent=117 // pred_check_branch
              %800 = sbr.rel (%p798) target = $region126
            $region125: #{tpu_custom_call.1} parent=117 // pred_region
              %s801 = sshll.u32 1, %s790
              %s802 = ssub.s32 %s801, 1
              %s803 = sdiv.u32.pop %s779, 17
              %s804 = srem.u32.pop %s779, 17
              // While loop
              $region127: #{tpu_custom_call.1} parent=125 // loop_pre_header
                _
              $region128: #{tpu_custom_call.1} parent=125 // loop_header
                %s806 = sphi 0, %s808
                %p807 = scmp.ge.s32.totalorder %s806, %s803
                %s811 = sphi 0, %s850
                %s812 = sphi %s789, %s853
                %s813 = sphi %s772, %s854
              $region129: #{tpu_custom_call.1} parent=125 // loop_header_branch
                %810 = sbr.rel (%p807) target = $region133
              $region130: #{tpu_custom_call.1} parent=125 // loop_body
                %v814 = vld [vmem:[%s812] sm:%s802]
                %815 = vst [vmem:[%s813] sm:%s802] %v814
                %v816 = vld [vmem:[%s812 + $0x28] sm:%s802]
                %817 = vst [vmem:[%s813 + $0x20] sm:%s802] %v816
                %v818 = vld [vmem:[%s812 + $0x50] sm:%s802]
                %819 = vst [vmem:[%s813 + $0x40] sm:%s802] %v818
                %v820 = vld [vmem:[%s812 + $0x78] sm:%s802]
                %821 = vst [vmem:[%s813 + $0x60] sm:%s802] %v820
                %v822 = vld [vmem:[%s812 + $0xa0] sm:%s802]
                %823 = vst [vmem:[%s813 + $0x80] sm:%s802] %v822
                %v824 = vld [vmem:[%s812 + $0xc8] sm:%s802]
                %825 = vst [vmem:[%s813 + $0xa0] sm:%s802] %v824
                %v826 = vld [vmem:[%s812 + $0xf0] sm:%s802]
                %827 = vst [vmem:[%s813 + $0xc0] sm:%s802] %v826
                %v828 = vld [vmem:[%s812 + $0x118] sm:%s802]
                %829 = vst [vmem:[%s813 + $0xe0] sm:%s802] %v828
                %v830 = vld [vmem:[%s812 + $0x140] sm:%s802]
                %831 = vst [vmem:[%s813 + $0x100] sm:%s802] %v830
                %v832 = vld [vmem:[%s812 + $0x168] sm:%s802]
                %833 = vst [vmem:[%s813 + $0x120] sm:%s802] %v832
                %v834 = vld [vmem:[%s812 + $0x190] sm:%s802]
                %835 = vst [vmem:[%s813 + $0x140] sm:%s802] %v834
                %v836 = vld [vmem:[%s812 + $0x1b8] sm:%s802]
                %837 = vst [vmem:[%s813 + $0x160] sm:%s802] %v836
                %v838 = vld [vmem:[%s812 + $0x1e0] sm:%s802]
                %839 = vst [vmem:[%s813 + $0x180] sm:%s802] %v838
                %v840 = vld [vmem:[%s812 + $0x208] sm:%s802]
                %841 = vst [vmem:[%s813 + $0x1a0] sm:%s802] %v840
                %v842 = vld [vmem:[%s812 + $0x230] sm:%s802]
                %843 = vst [vmem:[%s813 + $0x1c0] sm:%s802] %v842
                %v844 = vld [vmem:[%s812 + $0x258] sm:%s802]
                %845 = vst [vmem:[%s813 + $0x1e0] sm:%s802] %v844
                %v846 = vld [vmem:[%s812 + $0x280] sm:%s802]
                %847 = vst [vmem:[%s813 + $0x200] sm:%s802] %v846
                %s848 = sadd.s32 1, %s811
                %p849 = scmp.ge.s32.totalorder %s848, %s803
                %s850 = scalar_select %p849, 0, %s848
                %s851 = smul.u32 %s850, 680
                %s852 = smul.u32 %s850, 544
                %s853 = scalar_lea.vmem %s789, %s851
                %s854 = scalar_lea.vmem %s772, %s852 [#allocation3]
              $region131: #{tpu_custom_call.1} parent=125 // loop_footer
                %s808 = sadd.s32 %s806, 1
              $region132: #{tpu_custom_call.1} parent=125 // loop_footer_branch
                %805 = sbr.rel target = $region128
              $region133: #{tpu_custom_call.1} parent=125 // loop_exit
                _
              %s855 = sdiv.u32.pop %s779, 17
              %s856 = srem.u32.pop %s779, 17
              %s857 = smul.u32 %s855, 17
              %s858 = smul.u32 40, %s857
              %s859 = scalar_lea.vmem %s789, %s858
              %s860 = smul.u32 32, %s857
              %s861 = scalar_lea.vmem %s772, %s860 [#allocation3]
              // While loop
              $region134: #{tpu_custom_call.1} parent=125 // loop_pre_header
                _
              $region135: #{tpu_custom_call.1} parent=125 // loop_header
                %s863 = sphi 0, %s865
                %p864 = scmp.ge.s32.totalorder %s863, %s856
                %s868 = sphi 0, %s875
                %s869 = sphi %s859, %s878
                %s870 = sphi %s861, %s879
              $region136: #{tpu_custom_call.1} parent=125 // loop_header_branch
                %867 = sbr.rel (%p864) target = $region140
              $region137: #{tpu_custom_call.1} parent=125 // loop_body
                %v871 = vld [vmem:[%s869] sm:%s802]
                %872 = vst [vmem:[%s870] sm:%s802] %v871
                %s873 = sadd.s32 1, %s868
                %p874 = scmp.ge.s32.totalorder %s873, %s856
                %s875 = scalar_select %p874, 0, %s873
                %s876 = smul.u32 %s875, 40
                %s877 = smul.u32 %s875, 32
                %s878 = scalar_lea.vmem %s859, %s876
                %s879 = scalar_lea.vmem %s861, %s877 [#allocation3]
              $region138: #{tpu_custom_call.1} parent=125 // loop_footer
                %s865 = sadd.s32 %s863, 1
              $region139: #{tpu_custom_call.1} parent=125 // loop_footer_branch
                %862 = sbr.rel target = $region135
              $region140: #{tpu_custom_call.1} parent=125 // loop_exit
                _
            $region126: #{tpu_custom_call.1} parent=117 // pred_fallthru
              _
          $region118: #{tpu_custom_call.1} parent=113 // pred_fallthru
            _
          %1304 = vnop
        $region114: #{tpu_custom_call.1} parent=15 // pred_fallthru
          _
      $region16: #{tpu_custom_call.1} parent=5 // pred_fallthru
        _
      %p1305 = scmp.le.s32.totalorder 1, %s21
      %p1306 = scmp.lt.s32.totalorder %s21, 9
      %p1307 = pnand %p1305, %p1306
      %p1308 = pneg %p1307
      // Predicated region
      $region205: #{tpu_custom_call.1} parent=5 // pred_check
        _
      $region206: #{tpu_custom_call.1} parent=5 // pred_check_branch
        %1310 = sbr.rel (%p1307) target = $region208
      $region207: #{tpu_custom_call.1} parent=5 // pred_region
        %s1311 = ssub.s32 %s21, 1
        %s1312 = sand.u32 %s59, 1
        %s1313 = sand.u32 %s59, 1
        %s1314 = smul.addr %s1313, 544
        %s1315 = scalar_lea.vmem [#allocation2], %s1314
        // Predicated region
        $region209: #{tpu_custom_call.1} parent=207 // pred_check
          %p1316 = pneg %p72
        $region210: #{tpu_custom_call.1} parent=207 // pred_check_branch
          %1318 = sbr.rel (%p1316) target = $region212
        $region211: #{tpu_custom_call.1} parent=207 // pred_region
          _
        $region212: #{tpu_custom_call.1} parent=207 // pred_fallthru
          _
        %s1319 = sand.u32 %s91, 1
        %s1320 = sand.u32 %s91, 1
        %s1321 = smul.addr %s1320, 544
        %s1322 = scalar_lea.vmem [#allocation3], %s1321
        // Predicated region
        $region213: #{tpu_custom_call.1} parent=207 // pred_check
          %p1323 = pneg %p104
        $region214: #{tpu_custom_call.1} parent=207 // pred_check_branch
          %1325 = sbr.rel (%p1323) target = $region216
        $region215: #{tpu_custom_call.1} parent=207 // pred_region
          _
        $region216: #{tpu_custom_call.1} parent=207 // pred_fallthru
          _
        %s1326 = sand.u32 %s59, 1
        %s1327 = sand.u32 %s59, 1
        %s1328 = smul.addr %s1327, 544
        %s1329 = scalar_lea.vmem [#allocation2], %s1328
        %p1330 = pneg %p72
        %p1331 = pneg %p69
        %s1332 = sand.u32 %s91, 1
        %s1333 = sand.u32 %s91, 1
        %s1334 = smul.addr %s1333, 544
        %s1335 = scalar_lea.vmem [#allocation3], %s1334
        %p1336 = pneg %p104
        %p1337 = pneg %p101
        %p1338 = pneg %p130
        %p1339 = pneg %p127
        %s1340 = sand.u32 %s117, 1
        %s1341 = scalar_lea.sflag [#allocation5], %s1340
        %s1342 = sand.u32 %s117, 1
        %s1343 = smul.addr %s1342, 32
        %s1344 = scalar_lea.vmem [#allocation4], %s1343
        %p1345 = pneg %p156
        %p1346 = pneg %p153
        %s1347 = sand.u32 %s26, 1
        %s1348 = scalar_lea.sflag [#allocation7], %s1347
        %s1349 = sand.u32 %s143, 1
        %s1350 = smul.addr %s1349, 32
        %s1351 = scalar_lea.vmem [#allocation6], %s1350
        %p1352 = pneg %p182
        %p1353 = pneg %p179
        %s1354 = sand.u32 %s26, 1
        %s1355 = scalar_lea.sflag [#allocation7], %s1354
        %s1356 = sand.u32 %s169, 1
        %s1357 = smul.addr %s1356, 32
        %s1358 = scalar_lea.vmem [#allocation8], %s1357
        %p1359 = pneg %p208
        %p1360 = pneg %p205
        %s1361 = sand.u32 %s195, 1
        %s1362 = scalar_lea.sflag [#allocation10], %s1361
        %s1363 = sand.u32 %s195, 1
        %s1364 = smul.addr %s1363, 32
        %s1365 = scalar_lea.vmem [#allocation9], %s1364
        %s1366 = smul.u32 %s31, 2
        %s1367 = sadd.s32 %s1366, %s32
        %s1368 = smul.u32 17, %s1367
        %s1369 = smul.u32 4, %s33
        %s1370 = ssub.s32 67, %s1368
        %p1371 = scmp.lt.s32.totalorder %s1370, 17
        %s1372 = scalar_select %p1371, %s1370, 17
        %s1373 = smul.u32 8, %s1372
        %s1374 = ssub.s32 5, %s1369
        %p1375 = scmp.lt.s32.totalorder %s1374, 4
        %s1376 = scalar_select %p1375, %s1374, 4
        %s1377 = smul.u32 %s1373, %s1376
        %s1378 = smul.u32 %s31, 2
        %s1379 = sadd.s32 %s1378, %s32
        %s1380 = smul.u32 17, %s1379
        %s1381 = smul.u32 4, %s33
        %s1382 = ssub.s32 67, %s1380
        %p1383 = scmp.lt.s32.totalorder %s1382, 17
        %s1384 = scalar_select %p1383, %s1382, 17
        %s1385 = smul.u32 8, %s1384
        %s1386 = ssub.s32 5, %s1381
        %p1387 = scmp.lt.s32.totalorder %s1386, 4
        %s1388 = scalar_select %p1387, %s1386, 4
        %s1389 = smul.u32 %s1385, %s1388
        %p1390 = scmp.eq.s32.totalorder %s32, 0
        %p1391 = scmp.eq.s32.totalorder %s33, 0
        %p1392 = pnand %p1390, %p1391
        %p1393 = pneg %p1392
        // Predicated region
        $region217: #{tpu_custom_call.1} parent=207 // pred_check
          _
        $region218: #{tpu_custom_call.1} parent=207 // pred_check_branch
          %1395 = sbr.rel (%p1392) target = $region220
        $region219: #{tpu_custom_call.1} parent=207 // pred_region
          %1396 = vst [vmem:[%s1344] sm:$0xff] 0.0
          %1397 = vst [vmem:[%s1344 + $0x8] sm:$0xff] 0.0
          %1398 = vst [vmem:[%s1344 + $0x10] sm:$0xff] 0.0
          %1399 = vst [vmem:[%s1344 + $0x18] sm:$0xff] 0.0
          %1400 = vst [vmem:[%s1351] sm:$0xff] 0.0
          %1401 = vst [vmem:[%s1351 + $0x8] sm:$0xff] 0.0
          %1402 = vst [vmem:[%s1351 + $0x10] sm:$0xff] 0.0
          %1403 = vst [vmem:[%s1351 + $0x18] sm:$0xff] 0.0
          %1404 = vst [vmem:[%s1358] sm:$0xff] 0.0
          %1405 = vst [vmem:[%s1358 + $0x8] sm:$0xff] 0.0
          %1406 = vst [vmem:[%s1358 + $0x10] sm:$0xff] 0.0
          %1407 = vst [vmem:[%s1358 + $0x18] sm:$0xff] 0.0
          %1408 = vst [vmem:[%s1365] sm:$0xff] 0.0
          %1409 = vst [vmem:[%s1365 + $0x8] sm:$0xff] 0.0
          %1410 = vst [vmem:[%s1365 + $0x10] sm:$0xff] 0.0
          %1411 = vst [vmem:[%s1365 + $0x18] sm:$0xff] 0.0
        $region220: #{tpu_custom_call.1} parent=207 // pred_fallthru
          _
        %s1412 = smul.u32 %s31, 2
        %s1413 = sadd.s32 %s1412, %s32
        %s1414 = smul.u32 %s1413, 136
        %s1415 = ssub.s32 530, %s1414
        %v1416 = vlaneseq
        %v1417 = vshrl.u32 %v1416, 7
        %v1418 = vlaneseq
        %v1419 = vand.u32 %v1418, 127
        %v1420 = vadd.s32 %v1419, 128
        %v1421 = vadd.s32 %v1419, 256
        %v1422 = vadd.s32 %v1419, 384
        %s1423 = smul.u32 %s33, 512
        %v1424 = vstv %s1423
        %v1425 = vadd.s32 %v1424, %v1419
        %v1426 = vadd.s32 %v1424, %v1420
        %v1427 = vadd.s32 %v1424, %v1421
        %v1428 = vadd.s32 %v1424, %v1422
        %vm1429 = vcmp.lt.s32.totalorder %v1425, 513
        %vm1430 = vcmp.lt.s32.totalorder %v1426, 513
        %vm1431 = vcmp.lt.s32.totalorder %v1427, 513
        %vm1432 = vcmp.lt.s32.totalorder %v1428, 513
        loop: start=0, step=1, limit=17
        $region221: #{tpu_custom_call.1} parent=207 // loop_pre_header
          _
        $region222: #{tpu_custom_call.1} parent=207 // loop_header
          %s1434 = sphi 0, %s1438
          %p1435 = scmp.ge.s32.totalorder %s1434, 17
          %v1439 = vphi 0.0, %v1505
          %v1440 = vphi 0.0, %v1506
          %v1441 = vphi 0.0, %v1507
          %v1442 = vphi 0.0, %v1508
          %v1443 = vphi 0.0, %v1513
          %v1444 = vphi 0.0, %v1514
          %v1445 = vphi 0.0, %v1515
          %v1446 = vphi 0.0, %v1516
          %v1447 = vphi 0.0, %v1541
          %v1448 = vphi 0.0, %v1542
          %v1449 = vphi 0.0, %v1543
          %v1450 = vphi 0.0, %v1544
          %v1451 = vphi 0.0, %v1549
          %v1452 = vphi 0.0, %v1550
          %v1453 = vphi 0.0, %v1551
          %v1454 = vphi 0.0, %v1552
        $region223: #{tpu_custom_call.1} parent=207 // loop_header_branch
          %1437 = sbr.rel (%p1435) target = $region227
        $region224: #{tpu_custom_call.1} parent=207 // loop_body
          %s1455 = smul.u32 %s1434, 8
          %v1456 = vstv %s1455
          %v1457 = vadd.s32 %v1417, %v1456
          %v1458 = vstv %s1415
          %vm1459 = vcmp.lt.s32.totalorder %v1457, %v1458
          %v1460 = vsel %vm1459, 1, 0
          %vm1461 = vcmp.eq.s32.totalorder %v1460, 1
          %v1462 = vsel %vm1429, 1, 0
          %v1463 = vsel %vm1430, 1, 0
          %v1464 = vsel %vm1431, 1, 0
          %v1465 = vsel %vm1432, 1, 0
          %vm1466 = vcmp.eq.s32.totalorder %v1462, 1
          %vm1467 = vcmp.eq.s32.totalorder %v1463, 1
          %vm1468 = vcmp.eq.s32.totalorder %v1464, 1
          %vm1469 = vcmp.eq.s32.totalorder %v1465, 1
          %vm1470 = vmand %vm1461, %vm1466
          %vm1471 = vmand %vm1461, %vm1467
          %vm1472 = vmand %vm1461, %vm1468
          %vm1473 = vmand %vm1461, %vm1469
          %s1474 = sshra.s32 %s1455, 3
          %s1475 = sand.u32 %s1455, 7
          %s1476 = smul.u32 %s1474, 4
          %s1477 = smul.addr %s1476, 8
          %s1478 = scalar_lea.vmem %s1315, %s1477 [#allocation2]
          %v1479 = vld [vmem:[%s1478] sm:$0xff]
          %v1480 = vld [vmem:[%s1478 + $0x8] sm:$0xff]
          %v1481 = vld [vmem:[%s1478 + $0x10] sm:$0xff]
          %v1482 = vld [vmem:[%s1478 + $0x18] sm:$0xff]
          %v1483 = vsel %vm1470, %v1479, 1.0
          %v1484 = vsel %vm1471, %v1480, 1.0
          %v1485 = vsel %vm1472, %v1481, 1.0
          %v1486 = vsel %vm1473, %v1482, 1.0
          %s1487 = smul.addr %s1476, 8
          %s1488 = scalar_lea.vmem %s1322, %s1487 [#allocation3]
          %v1489 = vld [vmem:[%s1488] sm:$0xff]
          %v1490 = vld [vmem:[%s1488 + $0x8] sm:$0xff]
          %v1491 = vld [vmem:[%s1488 + $0x10] sm:$0xff]
          %v1492 = vld [vmem:[%s1488 + $0x18] sm:$0xff]
          %v1493 = vsel %vm1470, %v1489, 1.0
          %v1494 = vsel %vm1471, %v1490, 1.0
          %v1495 = vsel %vm1472, %v1491, 1.0
          %v1496 = vsel %vm1473, %v1492, 1.0
          %v1497 = vsub.f32 %v1493, %v1483
          %v1498 = vsub.f32 %v1494, %v1484
          %v1499 = vsub.f32 %v1495, %v1485
          %v1500 = vsub.f32 %v1496, %v1486
          %v1501 = vmul.f32 %v1497, %v1497
          %v1502 = vmul.f32 %v1498, %v1498
          %v1503 = vmul.f32 %v1499, %v1499
          %v1504 = vmul.f32 %v1500, %v1500
          %v1505 = vadd.f32 %v1439, %v1501
          %v1506 = vadd.f32 %v1440, %v1502
          %v1507 = vadd.f32 %v1441, %v1503
          %v1508 = vadd.f32 %v1442, %v1504
          %v1509 = vmul.f32 %v1493, %v1493
          %v1510 = vmul.f32 %v1494, %v1494
          %v1511 = vmul.f32 %v1495, %v1495
          %v1512 = vmul.f32 %v1496, %v1496
          %v1513 = vadd.f32 %v1443, %v1509
          %v1514 = vadd.f32 %v1444, %v1510
          %v1515 = vadd.f32 %v1445, %v1511
          %v1516 = vadd.f32 %v1446, %v1512
          %v1517 = vlog2.pop %v1483
          %v1518 = vmul.f32 %v1517, 0.6931472
          %v1519 = vlog2.pop %v1484
          %v1520 = vmul.f32 %v1519, 0.6931472
          %v1521 = vlog2.pop %v1485
          %v1522 = vmul.f32 %v1521, 0.6931472
          %v1523 = vlog2.pop %v1486
          %v1524 = vmul.f32 %v1523, 0.6931472
          %v1525 = vlog2.pop %v1493
          %v1526 = vmul.f32 %v1525, 0.6931472
          %v1527 = vlog2.pop %v1494
          %v1528 = vmul.f32 %v1527, 0.6931472
          %v1529 = vlog2.pop %v1495
          %v1530 = vmul.f32 %v1529, 0.6931472
          %v1531 = vlog2.pop %v1496
          %v1532 = vmul.f32 %v1531, 0.6931472
          %v1533 = vsub.f32 %v1518, %v1526
          %v1534 = vsub.f32 %v1520, %v1528
          %v1535 = vsub.f32 %v1522, %v1530
          %v1536 = vsub.f32 %v1524, %v1532
          %v1537 = vand.u32 2147483647, %v1533
          %v1538 = vand.u32 2147483647, %v1534
          %v1539 = vand.u32 2147483647, %v1535
          %v1540 = vand.u32 2147483647, %v1536
          %v1541 = vadd.f32 %v1447, %v1537
          %v1542 = vadd.f32 %v1448, %v1538
          %v1543 = vadd.f32 %v1449, %v1539
          %v1544 = vadd.f32 %v1450, %v1540
          %v1545 = vand.u32 2147483647, %v1497
          %v1546 = vand.u32 2147483647, %v1498
          %v1547 = vand.u32 2147483647, %v1499
          %v1548 = vand.u32 2147483647, %v1500
          %v1549 = vadd.f32 %v1451, %v1545
          %v1550 = vadd.f32 %v1452, %v1546
          %v1551 = vadd.f32 %v1453, %v1547
          %v1552 = vadd.f32 %v1454, %v1548
        $region225: #{tpu_custom_call.1} parent=207 // loop_footer
          %s1438 = sadd.s32 1, %s1434
        $region226: #{tpu_custom_call.1} parent=207 // loop_footer_branch
          %1433 = sbr.rel target = $region222
        $region227: #{tpu_custom_call.1} parent=207 // loop_exit
          _
        %v1553 = vld [vmem:[%s1344] sm:$0xff]
        %v1554 = vld [vmem:[%s1344 + $0x8] sm:$0xff]
        %v1555 = vld [vmem:[%s1344 + $0x10] sm:$0xff]
        %v1556 = vld [vmem:[%s1344 + $0x18] sm:$0xff]
        %v1557 = vadd.f32 %v1553, %v1439
        %v1558 = vadd.f32 %v1554, %v1440
        %v1559 = vadd.f32 %v1555, %v1441
        %v1560 = vadd.f32 %v1556, %v1442
        %1561 = vst [vmem:[%s1344] sm:$0xff] %v1557
        %1562 = vst [vmem:[%s1344 + $0x8] sm:$0xff] %v1558
        %1563 = vst [vmem:[%s1344 + $0x10] sm:$0xff] %v1559
        %1564 = vst [vmem:[%s1344 + $0x18] sm:$0xff] %v1560
        %v1565 = vld [vmem:[%s1351] sm:$0xff]
        %v1566 = vld [vmem:[%s1351 + $0x8] sm:$0xff]
        %v1567 = vld [vmem:[%s1351 + $0x10] sm:$0xff]
        %v1568 = vld [vmem:[%s1351 + $0x18] sm:$0xff]
        %v1569 = vadd.f32 %v1565, %v1443
        %v1570 = vadd.f32 %v1566, %v1444
        %v1571 = vadd.f32 %v1567, %v1445
        %v1572 = vadd.f32 %v1568, %v1446
        %1573 = vst [vmem:[%s1351] sm:$0xff] %v1569
        %1574 = vst [vmem:[%s1351 + $0x8] sm:$0xff] %v1570
        %1575 = vst [vmem:[%s1351 + $0x10] sm:$0xff] %v1571
        %1576 = vst [vmem:[%s1351 + $0x18] sm:$0xff] %v1572
        %v1577 = vld [vmem:[%s1358] sm:$0xff]
        %v1578 = vld [vmem:[%s1358 + $0x8] sm:$0xff]
        %v1579 = vld [vmem:[%s1358 + $0x10] sm:$0xff]
        %v1580 = vld [vmem:[%s1358 + $0x18] sm:$0xff]
        %v1581 = vadd.f32 %v1577, %v1447
        %v1582 = vadd.f32 %v1578, %v1448
        %v1583 = vadd.f32 %v1579, %v1449
        %v1584 = vadd.f32 %v1580, %v1450
        %1585 = vst [vmem:[%s1358] sm:$0xff] %v1581
        %1586 = vst [vmem:[%s1358 + $0x8] sm:$0xff] %v1582
        %1587 = vst [vmem:[%s1358 + $0x10] sm:$0xff] %v1583
        %1588 = vst [vmem:[%s1358 + $0x18] sm:$0xff] %v1584
        %v1589 = vld [vmem:[%s1365] sm:$0xff]
        %v1590 = vld [vmem:[%s1365 + $0x8] sm:$0xff]
        %v1591 = vld [vmem:[%s1365 + $0x10] sm:$0xff]
        %v1592 = vld [vmem:[%s1365 + $0x18] sm:$0xff]
        %v1593 = vadd.f32 %v1589, %v1451
        %v1594 = vadd.f32 %v1590, %v1452
        %v1595 = vadd.f32 %v1591, %v1453
        %v1596 = vadd.f32 %v1592, %v1454
        %1597 = vst [vmem:[%s1365] sm:$0xff] %v1593
        %1598 = vst [vmem:[%s1365 + $0x8] sm:$0xff] %v1594
        %1599 = vst [vmem:[%s1365 + $0x10] sm:$0xff] %v1595
        %1600 = vst [vmem:[%s1365 + $0x18] sm:$0xff] %v1596
        %s1601 = sand.u32 %s117, 1
        %s1602 = scalar_lea.sflag [#allocation5], %s1601
        %s1603 = sand.u32 %s117, 1
        %s1604 = smul.addr %s1603, 32
        %s1605 = scalar_lea.vmem [#allocation4], %s1604
        %s1606 = sand.u32 %s26, 1
        %s1607 = scalar_lea.sflag [#allocation7], %s1606
        %s1608 = sand.u32 %s143, 1
        %s1609 = smul.addr %s1608, 32
        %s1610 = scalar_lea.vmem [#allocation6], %s1609
        %s1611 = sand.u32 %s26, 1
        %s1612 = scalar_lea.sflag [#allocation7], %s1611
        %s1613 = sand.u32 %s169, 1
        %s1614 = smul.addr %s1613, 32
        %s1615 = scalar_lea.vmem [#allocation8], %s1614
        %s1616 = sand.u32 %s195, 1
        %s1617 = scalar_lea.sflag [#allocation10], %s1616
        %s1618 = sand.u32 %s195, 1
        %s1619 = smul.addr %s1618, 32
        %s1620 = scalar_lea.vmem [#allocation9], %s1619
        // Predicated region
        $region228: #{tpu_custom_call.1} parent=207 // pred_check
          %p1621 = pneg %p127
        $region229: #{tpu_custom_call.1} parent=207 // pred_check_branch
          %1623 = sbr.rel (%p1621) target = $region231
        $region230: #{tpu_custom_call.1} parent=207 // pred_region
          %1625 = vsyncadd %s1602, 0
          %s1626 = smul.addr %s31, 4
          %s1627 = smul.addr %s1626, 8
          %s1628 = scalar_lea.hbm %s2, %s1627
          %s1630 = sshll.u32 %s1605, 4
          %s1631 = int_to_ptr.vmem [resolvable:$true] %s1630
          %s1632 = sshll.u32 %s1628, 4
          %s1633 = int_to_ptr.hbm [resolvable:$true] %s1632
          %1635 = dma.vmem_to_hbm [thread:$0]  %s1631, 512, %s1633, %s1602
        $region231: #{tpu_custom_call.1} parent=207 // pred_fallthru
          _
        // Predicated region
        $region232: #{tpu_custom_call.1} parent=207 // pred_check
          %p1636 = pneg %p153
        $region233: #{tpu_custom_call.1} parent=207 // pred_check_branch
          %1638 = sbr.rel (%p1636) target = $region235
        $region234: #{tpu_custom_call.1} parent=207 // pred_region
          %1640 = vsyncadd %s1607, 0
          %s1641 = smul.addr %s31, 4
          %s1642 = smul.addr %s1641, 8
          %s1643 = scalar_lea.hbm %s3, %s1642
          %s1645 = sshll.u32 %s1610, 4
          %s1646 = int_to_ptr.vmem [resolvable:$true] %s1645
          %s1647 = sshll.u32 %s1643, 4
          %s1648 = int_to_ptr.hbm [resolvable:$true] %s1647
          %1650 = dma.vmem_to_hbm [thread:$0]  %s1646, 512, %s1648, %s1607
        $region235: #{tpu_custom_call.1} parent=207 // pred_fallthru
          _
        // Predicated region
        $region236: #{tpu_custom_call.1} parent=207 // pred_check
          %p1651 = pneg %p179
        $region237: #{tpu_custom_call.1} parent=207 // pred_check_branch
          %1653 = sbr.rel (%p1651) target = $region239
        $region238: #{tpu_custom_call.1} parent=207 // pred_region
          %1655 = vsyncadd %s1612, 0
          %s1656 = smul.addr %s31, 4
          %s1657 = smul.addr %s1656, 8
          %s1658 = scalar_lea.hbm %s4, %s1657
          %s1660 = sshll.u32 %s1615, 4
          %s1661 = int_to_ptr.vmem [resolvable:$true] %s1660
          %s1662 = sshll.u32 %s1658, 4
          %s1663 = int_to_ptr.hbm [resolvable:$true] %s1662
          %1665 = dma.vmem_to_hbm [thread:$0]  %s1661, 512, %s1663, %s1612
        $region239: #{tpu_custom_call.1} parent=207 // pred_fallthru
          _
        // Predicated region
        $region240: #{tpu_custom_call.1} parent=207 // pred_check
          %p1666 = pneg %p205
        $region241: #{tpu_custom_call.1} parent=207 // pred_check_branch
          %1668 = sbr.rel (%p1666) target = $region243
        $region242: #{tpu_custom_call.1} parent=207 // pred_region
          %1670 = vsyncadd %s1617, 0
          %s1671 = smul.addr %s31, 4
          %s1672 = smul.addr %s1671, 8
          %s1673 = scalar_lea.hbm %s5, %s1672
          %s1675 = sshll.u32 %s1620, 4
          %s1676 = int_to_ptr.vmem [resolvable:$true] %s1675
          %s1677 = sshll.u32 %s1673, 4
          %s1678 = int_to_ptr.hbm [resolvable:$true] %s1677
          %1680 = dma.vmem_to_hbm [thread:$0]  %s1676, 512, %s1678, %s1617
        $region243: #{tpu_custom_call.1} parent=207 // pred_fallthru
          _
      $region208: #{tpu_custom_call.1} parent=5 // pred_fallthru
        _
      %p1681 = scmp.le.s32.totalorder 2, %s21
      // Predicated region
      $region244: #{tpu_custom_call.1} parent=5 // pred_check
        %p1682 = pneg %p1681
      $region245: #{tpu_custom_call.1} parent=5 // pred_check_branch
        %1684 = sbr.rel (%p1682) target = $region247
      $region246: #{tpu_custom_call.1} parent=5 // pred_region
        %s1685 = ssub.s32 %s21, 2
        // Predicated region
        $region248: #{tpu_custom_call.1} parent=246 // pred_check
          %p1686 = pneg %p133
        $region249: #{tpu_custom_call.1} parent=246 // pred_check_branch
          %1688 = sbr.rel (%p1686) target = $region251
        $region250: #{tpu_custom_call.1} parent=246 // pred_region
          %s1689 = sand.u32 %s118, 1
          %s1690 = scalar_lea.sflag [#allocation5], %s1689
          %s1691 = sand.u32 %s118, 1
          %s1692 = smul.addr %s1691, 32
          %s1693 = scalar_lea.vmem [#allocation4], %s1692
          %1695 = dma.done %s1690, 512
        $region251: #{tpu_custom_call.1} parent=246 // pred_fallthru
          _
        // Predicated region
        $region252: #{tpu_custom_call.1} parent=246 // pred_check
          %p1696 = pneg %p159
        $region253: #{tpu_custom_call.1} parent=246 // pred_check_branch
          %1698 = sbr.rel (%p1696) target = $region255
        $region254: #{tpu_custom_call.1} parent=246 // pred_region
          %s1699 = sand.u32 %s27, 1
          %s1700 = scalar_lea.sflag [#allocation7], %s1699
          %s1701 = sand.u32 %s144, 1
          %s1702 = smul.addr %s1701, 32
          %s1703 = scalar_lea.vmem [#allocation6], %s1702
          %1705 = dma.done %s1700, 512
        $region255: #{tpu_custom_call.1} parent=246 // pred_fallthru
          _
        // Predicated region
        $region256: #{tpu_custom_call.1} parent=246 // pred_check
          %p1706 = pneg %p185
        $region257: #{tpu_custom_call.1} parent=246 // pred_check_branch
          %1708 = sbr.rel (%p1706) target = $region259
        $region258: #{tpu_custom_call.1} parent=246 // pred_region
          %s1709 = sand.u32 %s27, 1
          %s1710 = scalar_lea.sflag [#allocation7], %s1709
          %s1711 = sand.u32 %s170, 1
          %s1712 = smul.addr %s1711, 32
          %s1713 = scalar_lea.vmem [#allocation8], %s1712
          %1715 = dma.done %s1710, 512
        $region259: #{tpu_custom_call.1} parent=246 // pred_fallthru
          _
        // Predicated region
        $region260: #{tpu_custom_call.1} parent=246 // pred_check
          %p1716 = pneg %p211
        $region261: #{tpu_custom_call.1} parent=246 // pred_check_branch
          %1718 = sbr.rel (%p1716) target = $region263
        $region262: #{tpu_custom_call.1} parent=246 // pred_region
          %s1719 = sand.u32 %s196, 1
          %s1720 = scalar_lea.sflag [#allocation10], %s1719
          %s1721 = sand.u32 %s196, 1
          %s1722 = smul.addr %s1721, 32
          %s1723 = scalar_lea.vmem [#allocation9], %s1722
          %1725 = dma.done %s1720, 512
        $region263: #{tpu_custom_call.1} parent=246 // pred_fallthru
          _
      $region247: #{tpu_custom_call.1} parent=5 // pred_fallthru
        _
    $region6: #{tpu_custom_call.1} parent=1 // loop_footer
      %s25 = sadd.s32 1, %s21
    $region7: #{tpu_custom_call.1} parent=1 // loop_footer_branch
      %20 = sbr.rel target = $region3
    $region8: #{tpu_custom_call.1} parent=1 // loop_exit
      _
    %1726 = vsyncpa [#allocation5], 1
    %s1727 = scalar_lea.sflag [#allocation5], 1
    %1728 = vsyncpa %s1727, 1
    %1729 = vsyncpa [#allocation7], 1
    %s1730 = scalar_lea.sflag [#allocation7], 1
    %1731 = vsyncpa %s1730, 1
    %1732 = vsyncpa [#allocation10], 1
    %s1733 = scalar_lea.sflag [#allocation10], 1
    %1734 = vsyncpa %s1733, 1

</llo_original>
